<compile_context>
chip_gen: v5e
topology: v5e:2x2
jax: 0.10.0
libtpu: 0.0.40
codegen_flags: <defaults>
</compile_context>

<pallas_src>
import jax
import jax.numpy as jnp
from jax import lax
from jax.experimental import pallas as pl
from jax.experimental.pallas import tpu as pltpu

EPS = 1e-5


def debottleneck_kernel(x_ref, w1_ref, m_ref, s_ref, w3_ref,
                        foldw_ref, spreadw_ref, folde_ref, spreade_ref,
                        g1_ref, b1_ref, g2_ref, b2_ref, g3_ref, b3_ref,
                        o_ref):
    # x_ref      : (N*H, W*Cin)   lane-packed input slab (lane = x*Cin + ci); also the residual
    # w1_ref     : (W*Cin, W*Cw)  block-diagonal 1x1-conv matrix
    # m_ref      : (3, W*Cw, W*Cw) banded 3x3-conv matrices, one per ky tap
    # s_ref      : (2, N*H, N*H)  row-shift matrices for dy = -1 / +1 (zero across images)
    # w3_ref     : (W*Cw, W*Cexp) block-diagonal 1x1-conv matrix
    # fold*/spread*: per-channel reduce / broadcast matrices for lane-packed BN stats
    # g*/b*      : (1, W*C)       BN gamma/beta already tiled onto the lane layout
    nh = x_ref.shape[0]
    wd = foldw_ref.shape[0] // foldw_ref.shape[1]          # spatial width W
    inv_nhw = 1.0 / float(nh * wd)                         # 1 / (N*H*W)

    def bn(acc, fold, spread, gamma_l, beta_l, relu):
        # training-mode BatchNorm over (N, H, W) with channels packed on lanes.
        lane_sum = jnp.sum(acc, axis=0, keepdims=True)                         # (1, W*C)
        mean_l = jnp.dot(jnp.dot(lane_sum, fold, preferred_element_type=jnp.float32),
                         spread, preferred_element_type=jnp.float32) * inv_nhw
        cen = acc - mean_l
        sq_sum = jnp.sum(cen * cen, axis=0, keepdims=True)
        var_l = jnp.dot(jnp.dot(sq_sum, fold, preferred_element_type=jnp.float32),
                        spread, preferred_element_type=jnp.float32) * inv_nhw
        y = cen * (gamma_l * lax.rsqrt(var_l + EPS)) + beta_l
        return jnp.maximum(y, 0.0) if relu else y

    x = x_ref[...]                                                             # (NH, W*Cin)

    # ---- conv1 (1x1) -> bn1 -> relu ----
    h1 = jnp.dot(x, w1_ref[...], preferred_element_type=jnp.float32)           # (NH, W*Cw)
    h1 = bn(h1, foldw_ref[...], spreadw_ref[...], g1_ref[...], b1_ref[...], True)

    # ---- conv2 (3x3, stride 1, pad 1): banded lane matmuls + row-shift matmuls ----
    h2 = jnp.dot(h1, m_ref[1], preferred_element_type=jnp.float32)             # dy = 0
    h2 = h2 + jnp.dot(jnp.dot(s_ref[0], h1, preferred_element_type=jnp.float32),
                      m_ref[0], preferred_element_type=jnp.float32)            # dy = -1
    h2 = h2 + jnp.dot(jnp.dot(s_ref[1], h1, preferred_element_type=jnp.float32),
                      m_ref[2], preferred_element_type=jnp.float32)            # dy = +1
    h2 = bn(h2, foldw_ref[...], spreadw_ref[...], g2_ref[...], b2_ref[...], True)

    # ---- conv3 (1x1) -> bn3 ----
    h3 = jnp.dot(h2, w3_ref[...], preferred_element_type=jnp.float32)          # (NH, W*Cexp)
    h3 = bn(h3, folde_ref[...], spreade_ref[...], g3_ref[...], b3_ref[...], False)

    # ---- residual add + relu (lane-dense, unmasked store) ----
    o_ref[...] = jnp.maximum(h3 + x, 0.0)


def debottleneck_forward(x_nchw, w1, g1, b1, w2, g2, b2, w3, g3, b3):
    """x_nchw: (N, Cin, H, W) f32; weights OIHW; returns (N, Cin, H, W) f32."""
    f32 = jnp.float32
    N, Cin, H, W = x_nchw.shape
    Cw = int(w1.shape[0])            # width = planes * base_width/64 * groups
    Cexp = int(w3.shape[0])          # planes * expansion
    assert Cexp == Cin, "identity residual (upsample=None) requires inplanes == planes*4"
    NH = N * H

    # NCHW -> lane-packed (N*H, W*C) slab (channels fastest on the lane axis).
    # TODO(synk): fold this repack / the inverse into the kernel's own load/store path
    #             for production shapes; here it is a single tiny XLA op.
    x_slab = jnp.transpose(x_nchw, (0, 2, 3, 1)).astype(f32).reshape(NH, W * Cin)

    # 1x1 convs -> block-diagonal matrices over the lane-packed x axis.
    eye_w = jnp.eye(W, dtype=f32)
    w1m = jnp.transpose(w1[:, :, 0, 0], (1, 0)).astype(f32)        # (Cin, Cw)
    w1_big = jnp.kron(eye_w, w1m)                                  # (W*Cin, W*Cw)
    w3m = jnp.transpose(w3[:, :, 0, 0], (1, 0)).astype(f32)        # (Cw, Cexp)
    w3_big = jnp.kron(eye_w, w3m)                                  # (W*Cw, W*Cexp)

    # 3x3 conv -> one banded (W*Cw, W*Cw) matrix per ky tap (x-padding folded in).
    w2t = jnp.transpose(w2, (2, 3, 1, 0)).astype(f32)              # (ky, kx, ci, co)
    xs = jnp.arange(W)[:, None]                                    # source x
    xo = jnp.arange(W)[None, :]                                    # output x
    dx = xs - xo
    valid = (jnp.abs(dx) <= 1).astype(f32)
    kx_idx = jnp.clip(dx + 1, 0, 2)
    m_all = jnp.stack([
        jnp.transpose(w2t[ky][kx_idx] * valid[:, :, None, None],
                      (0, 2, 1, 3)).reshape(W * Cw, W * Cw)
        for ky in range(3)])                                       # (3, W*Cw, W*Cw)

    # Row-shift matrices for dy = -1 / +1 (zero across image boundaries -> y-padding).
    ro = jnp.arange(NH)[:, None]
    rs = jnp.arange(NH)[None, :]
    same = (rs // H) == (ro // H)
    s_all = jnp.stack([((rs == ro - 1) & same).astype(f32),
                       ((rs == ro + 1) & same).astype(f32)])       # (2, NH, NH)

    # Per-channel fold (lane -> channel) and spread (channel -> lane) matrices for BN.
    fold_w = jnp.tile(jnp.eye(Cw, dtype=f32), (W, 1))              # (W*Cw, Cw)
    spread_w = jnp.tile(jnp.eye(Cw, dtype=f32), (1, W))            # (Cw, W*Cw)
    fold_e = jnp.tile(jnp.eye(Cexp, dtype=f32), (W, 1))            # (W*Cexp, Cexp)
    spread_e = jnp.tile(jnp.eye(Cexp, dtype=f32), (1, W))          # (Cexp, W*Cexp)

    tile_lanes = lambda v: jnp.tile(v.astype(f32), W)[None, :]     # (1, W*C), lane = x*C + c
    g1_l, b1_l = tile_lanes(g1), tile_lanes(b1)
    g2_l, b2_l = tile_lanes(g2), tile_lanes(b2)
    g3_l, b3_l = tile_lanes(g3), tile_lanes(b3)

    args = (x_slab, w1_big, m_all, s_all, w3_big,
            fold_w, spread_w, fold_e, spread_e,
            g1_l, b1_l, g2_l, b2_l, g3_l, b3_l)

    in_bytes = sum(int(a.size) * 4 for a in args)
    out_bytes = NH * W * Cexp * 4
    flops = (2 * NH * ((W * Cin) * (W * Cw)          # conv1
                       + 3 * (W * Cw) * (W * Cw)     # conv2 banded taps
                       + (W * Cw) * (W * Cexp))      # conv3
             + 2 * 2 * NH * NH * (W * Cw))           # row-shift matmuls
    transcendentals = 2 * W * Cw + W * Cexp          # rsqrt lanes of the three BNs

    vmem = pl.BlockSpec(memory_space=pltpu.MemorySpace.VMEM)
    out_slab = pl.pallas_call(
        debottleneck_kernel,
        out_shape=jax.ShapeDtypeStruct((NH, W * Cexp), f32),
        in_specs=[vmem] * len(args),
        out_specs=vmem,
        compiler_params=pltpu.CompilerParams(
            vmem_limit_bytes=max(4 * (in_bytes + out_bytes), 8 << 20)),
        cost_estimate=pl.CostEstimate(flops=flops, transcendentals=transcendentals,
                                      bytes_accessed=in_bytes + out_bytes),
    )(*args)

    return jnp.transpose(out_slab.reshape(N, H, W, Cexp), (0, 3, 1, 2))


def ref_forward(x, w1, g1, b1, w2, g2, b2, w3, g3, b3):
    """Pure-JAX reference (NCHW), PyTorch deBottleneck forward in training mode."""
    def conv(x, w, pad):
        return lax.conv_general_dilated(
            x, w, window_strides=(1, 1), padding=((pad, pad), (pad, pad)),
            dimension_numbers=('NCHW', 'OIHW', 'NCHW'))

    def bn(x, g, b):
        mean = jnp.mean(x, axis=(0, 2, 3), keepdims=True)
        var = jnp.mean((x - mean) ** 2, axis=(0, 2, 3), keepdims=True)
        return ((x - mean) * lax.rsqrt(var + EPS) * g.reshape(1, -1, 1, 1)
                + b.reshape(1, -1, 1, 1))

    out = jax.nn.relu(bn(conv(x, w1, 0), g1, b1))
    out = jax.nn.relu(bn(conv(out, w2, 1), g2, b2))
    out = bn(conv(out, w3, 0), g3, b3)
    return jax.nn.relu(out + x)


if __name__ == "__main__":
    # deBottleneck(inplanes=32, planes=8, stride=1, upsample=None): width=8, out=32.
    N, planes, H, W = 2, 8, 16, 16
    width = planes
    Cin = planes * 4            # inplanes == planes * expansion -> identity add valid

    key = jax.random.PRNGKey(0)
    kx, k1, k2, k3, kg1, kb1, kg2, kb2, kg3, kb3 = jax.random.split(key, 10)

    x = jax.random.normal(kx, (N, Cin, H, W), jnp.float32)
    w1 = 0.1 * jax.random.normal(k1, (width, Cin, 1, 1), jnp.float32)    # conv1x1, bias=False
    w2 = 0.1 * jax.random.normal(k2, (width, width, 3, 3), jnp.float32)  # conv3x3, bias=False
    w3 = 0.1 * jax.random.normal(k3, (Cin, width, 1, 1), jnp.float32)    # conv1x1, bias=False
    g1 = 1.0 + 0.1 * jax.random.normal(kg1, (width,), jnp.float32)
    b1 = 0.1 * jax.random.normal(kb1, (width,), jnp.float32)
    g2 = 1.0 + 0.1 * jax.random.normal(kg2, (width,), jnp.float32)
    b2 = 0.1 * jax.random.normal(kb2, (width,), jnp.float32)
    g3 = 1.0 + 0.1 * jax.random.normal(kg3, (Cin,), jnp.float32)
    b3 = 0.1 * jax.random.normal(kb3, (Cin,), jnp.float32)

    out = jax.block_until_ready(
        debottleneck_forward(x, w1, g1, b1, w2, g2, b2, w3, g3, b3))
    ref = jax.block_until_ready(
        ref_forward(x, w1, g1, b1, w2, g2, b2, w3, g3, b3))

    assert out.shape == (N, Cin, H, W)
    max_err = float(jnp.max(jnp.abs(out - ref)))
    assert jnp.allclose(out, ref, atol=5e-4, rtol=5e-4), max_err
    print("KERNEL_OK")
</pallas_src>

<mosaic_0001>
module attributes {stable_mosaic.version = 11 : i64} {
  func.func @debottleneck_kernel(%arg0: memref<32x512xf32, #tpu.memory_space<vmem>>, %arg1: memref<512x128xf32, #tpu.memory_space<vmem>>, %arg2: memref<3x128x128xf32, #tpu.memory_space<vmem>>, %arg3: memref<2x32x32xf32, #tpu.memory_space<vmem>>, %arg4: memref<128x512xf32, #tpu.memory_space<vmem>>, %arg5: memref<128x8xf32, #tpu.memory_space<vmem>>, %arg6: memref<8x128xf32, #tpu.memory_space<vmem>>, %arg7: memref<512x32xf32, #tpu.memory_space<vmem>>, %arg8: memref<32x512xf32, #tpu.memory_space<vmem>>, %arg9: memref<1x128xf32, #tpu.memory_space<vmem>>, %arg10: memref<1x128xf32, #tpu.memory_space<vmem>>, %arg11: memref<1x128xf32, #tpu.memory_space<vmem>>, %arg12: memref<1x128xf32, #tpu.memory_space<vmem>>, %arg13: memref<1x512xf32, #tpu.memory_space<vmem>>, %arg14: memref<1x512xf32, #tpu.memory_space<vmem>>, %arg15: memref<32x512xf32, #tpu.memory_space<vmem>>) attributes {dimension_semantics = [], scalar_prefetch = 0 : i64, scratch_operands = 0 : i64, tpu.core_type = #tpu.core_type<tc>} {
    %c0 = arith.constant 0 : index
    %c0_0 = arith.constant 0 : index
    %0 = vector.load %arg0[%c0, %c0_0] : memref<32x512xf32, #tpu.memory_space<vmem>>, vector<32x512xf32>
    %c0_1 = arith.constant 0 : index
    %c0_2 = arith.constant 0 : index
    %1 = vector.load %arg1[%c0_1, %c0_2] : memref<512x128xf32, #tpu.memory_space<vmem>>, vector<512x128xf32>
    %cst = arith.constant dense<0.000000e+00> : vector<32x128xf32>
    %2 = tpu.matmul %0, %1, %cst {dimension_numbers = #tpu.dot_dimension_numbers<[1], [0], [0], [1], [0, 0, 1, 1], [], []>} : vector<32x512xf32>, vector<512x128xf32>, vector<32x128xf32> -> vector<32x128xf32>
    %c0_3 = arith.constant 0 : index
    %c0_4 = arith.constant 0 : index
    %3 = vector.load %arg5[%c0_3, %c0_4] : memref<128x8xf32, #tpu.memory_space<vmem>>, vector<128x8xf32>
    %c0_5 = arith.constant 0 : index
    %c0_6 = arith.constant 0 : index
    %4 = vector.load %arg6[%c0_5, %c0_6] : memref<8x128xf32, #tpu.memory_space<vmem>>, vector<8x128xf32>
    %c0_7 = arith.constant 0 : index
    %c0_8 = arith.constant 0 : index
    %5 = vector.load %arg9[%c0_7, %c0_8] : memref<1x128xf32, #tpu.memory_space<vmem>>, vector<1x128xf32>
    %c0_9 = arith.constant 0 : index
    %c0_10 = arith.constant 0 : index
    %6 = vector.load %arg10[%c0_9, %c0_10] : memref<1x128xf32, #tpu.memory_space<vmem>>, vector<1x128xf32>
    %cst_11 = arith.constant dense<0.000000e+00> : vector<128xf32>
    %7 = vector.multi_reduction <add>, %2, %cst_11 [0] : vector<32x128xf32> to vector<128xf32>
    %8 = vector.shape_cast %7 : vector<128xf32> to vector<1x128xf32>
    %cst_12 = arith.constant dense<0.000000e+00> : vector<1x8xf32>
    %9 = tpu.matmul %8, %3, %cst_12 {dimension_numbers = #tpu.dot_dimension_numbers<[1], [0], [0], [1], [0, 0, 1, 1], [], []>} : vector<1x128xf32>, vector<128x8xf32>, vector<1x8xf32> -> vector<1x8xf32>
    %cst_13 = arith.constant dense<0.000000e+00> : vector<1x128xf32>
    %10 = tpu.matmul %9, %4, %cst_13 {dimension_numbers = #tpu.dot_dimension_numbers<[1], [0], [0], [1], [0, 0, 1, 1], [], []>} : vector<1x8xf32>, vector<8x128xf32>, vector<1x128xf32> -> vector<1x128xf32>
    %cst_14 = arith.constant 0.001953125 : f32
    %11 = vector.broadcast %cst_14 : f32 to vector<1x128xf32>
    %12 = arith.mulf %10, %11 : vector<1x128xf32>
    %13 = vector.broadcast %12 : vector<1x128xf32> to vector<32x128xf32>
    %14 = arith.subf %2, %13 : vector<32x128xf32>
    %15 = arith.mulf %14, %14 : vector<32x128xf32>
    %cst_15 = arith.constant dense<0.000000e+00> : vector<128xf32>
    %16 = vector.multi_reduction <add>, %15, %cst_15 [0] : vector<32x128xf32> to vector<128xf32>
    %17 = vector.shape_cast %16 : vector<128xf32> to vector<1x128xf32>
    %cst_16 = arith.constant dense<0.000000e+00> : vector<1x8xf32>
    %18 = tpu.matmul %17, %3, %cst_16 {dimension_numbers = #tpu.dot_dimension_numbers<[1], [0], [0], [1], [0, 0, 1, 1], [], []>} : vector<1x128xf32>, vector<128x8xf32>, vector<1x8xf32> -> vector<1x8xf32>
    %cst_17 = arith.constant dense<0.000000e+00> : vector<1x128xf32>
    %19 = tpu.matmul %18, %4, %cst_17 {dimension_numbers = #tpu.dot_dimension_numbers<[1], [0], [0], [1], [0, 0, 1, 1], [], []>} : vector<1x8xf32>, vector<8x128xf32>, vector<1x128xf32> -> vector<1x128xf32>
    %cst_18 = arith.constant 0.001953125 : f32
    %20 = vector.broadcast %cst_18 : f32 to vector<1x128xf32>
    %21 = arith.mulf %19, %20 : vector<1x128xf32>
    %cst_19 = arith.constant 9.99999974E-6 : f32
    %22 = vector.broadcast %cst_19 : f32 to vector<1x128xf32>
    %23 = arith.addf %21, %22 : vector<1x128xf32>
    %24 = math.rsqrt %23 : vector<1x128xf32>
    %25 = arith.mulf %5, %24 : vector<1x128xf32>
    %26 = vector.broadcast %25 : vector<1x128xf32> to vector<32x128xf32>
    %27 = arith.mulf %14, %26 : vector<32x128xf32>
    %28 = vector.broadcast %6 : vector<1x128xf32> to vector<32x128xf32>
    %29 = arith.addf %27, %28 : vector<32x128xf32>
    %cst_20 = arith.constant 0.000000e+00 : f32
    %30 = vector.broadcast %cst_20 : f32 to vector<32x128xf32>
    %31 = arith.maximumf %29, %30 : vector<32x128xf32>
    %c1 = arith.constant 1 : index
    %c0_21 = arith.constant 0 : index
    %c0_22 = arith.constant 0 : index
    %32 = vector.load %arg2[%c1, %c0_21, %c0_22] : memref<3x128x128xf32, #tpu.memory_space<vmem>>, vector<1x128x128xf32>
    %33 = vector.shape_cast %32 : vector<1x128x128xf32> to vector<128x128xf32>
    %cst_23 = arith.constant dense<0.000000e+00> : vector<32x128xf32>
    %34 = tpu.matmul %31, %33, %cst_23 {dimension_numbers = #tpu.dot_dimension_numbers<[1], [0], [0], [1], [0, 0, 1, 1], [], []>} : vector<32x128xf32>, vector<128x128xf32>, vector<32x128xf32> -> vector<32x128xf32>
    %c0_24 = arith.constant 0 : index
    %c0_25 = arith.constant 0 : index
    %c0_26 = arith.constant 0 : index
    %35 = vector.load %arg3[%c0_24, %c0_25, %c0_26] : memref<2x32x32xf32, #tpu.memory_space<vmem>>, vector<1x32x32xf32>
    %36 = vector.shape_cast %35 : vector<1x32x32xf32> to vector<32x32xf32>
    %cst_27 = arith.constant dense<0.000000e+00> : vector<32x128xf32>
    %37 = tpu.matmul %36, %31, %cst_27 {dimension_numbers = #tpu.dot_dimension_numbers<[1], [0], [0], [1], [0, 0, 1, 1], [], []>} : vector<32x32xf32>, vector<32x128xf32>, vector<32x128xf32> -> vector<32x128xf32>
    %c0_28 = arith.constant 0 : index
    %c0_29 = arith.constant 0 : index
    %c0_30 = arith.constant 0 : index
    %38 = vector.load %arg2[%c0_28, %c0_29, %c0_30] : memref<3x128x128xf32, #tpu.memory_space<vmem>>, vector<1x128x128xf32>
    %39 = vector.shape_cast %38 : vector<1x128x128xf32> to vector<128x128xf32>
    %cst_31 = arith.constant dense<0.000000e+00> : vector<32x128xf32>
    %40 = tpu.matmul %37, %39, %cst_31 {dimension_numbers = #tpu.dot_dimension_numbers<[1], [0], [0], [1], [0, 0, 1, 1], [], []>} : vector<32x128xf32>, vector<128x128xf32>, vector<32x128xf32> -> vector<32x128xf32>
    %41 = arith.addf %34, %40 : vector<32x128xf32>
    %c1_32 = arith.constant 1 : index
    %c0_33 = arith.constant 0 : index
    %c0_34 = arith.constant 0 : index
    %42 = vector.load %arg3[%c1_32, %c0_33, %c0_34] : memref<2x32x32xf32, #tpu.memory_space<vmem>>, vector<1x32x32xf32>
    %43 = vector.shape_cast %42 : vector<1x32x32xf32> to vector<32x32xf32>
    %cst_35 = arith.constant dense<0.000000e+00> : vector<32x128xf32>
    %44 = tpu.matmul %43, %31, %cst_35 {dimension_numbers = #tpu.dot_dimension_numbers<[1], [0], [0], [1], [0, 0, 1, 1], [], []>} : vector<32x32xf32>, vector<32x128xf32>, vector<32x128xf32> -> vector<32x128xf32>
    %c2 = arith.constant 2 : index
    %c0_36 = arith.constant 0 : index
    %c0_37 = arith.constant 0 : index
    %45 = vector.load %arg2[%c2, %c0_36, %c0_37] : memref<3x128x128xf32, #tpu.memory_space<vmem>>, vector<1x128x128xf32>
    %46 = vector.shape_cast %45 : vector<1x128x128xf32> to vector<128x128xf32>
    %cst_38 = arith.constant dense<0.000000e+00> : vector<32x128xf32>
    %47 = tpu.matmul %44, %46, %cst_38 {dimension_numbers = #tpu.dot_dimension_numbers<[1], [0], [0], [1], [0, 0, 1, 1], [], []>} : vector<32x128xf32>, vector<128x128xf32>, vector<32x128xf32> -> vector<32x128xf32>
    %48 = arith.addf %41, %47 : vector<32x128xf32>
    %c0_39 = arith.constant 0 : index
    %c0_40 = arith.constant 0 : index
    %49 = vector.load %arg5[%c0_39, %c0_40] : memref<128x8xf32, #tpu.memory_space<vmem>>, vector<128x8xf32>
    %c0_41 = arith.constant 0 : index
    %c0_42 = arith.constant 0 : index
    %50 = vector.load %arg6[%c0_41, %c0_42] : memref<8x128xf32, #tpu.memory_space<vmem>>, vector<8x128xf32>
    %c0_43 = arith.constant 0 : index
    %c0_44 = arith.constant 0 : index
    %51 = vector.load %arg11[%c0_43, %c0_44] : memref<1x128xf32, #tpu.memory_space<vmem>>, vector<1x128xf32>
    %c0_45 = arith.constant 0 : index
    %c0_46 = arith.constant 0 : index
    %52 = vector.load %arg12[%c0_45, %c0_46] : memref<1x128xf32, #tpu.memory_space<vmem>>, vector<1x128xf32>
    %cst_47 = arith.constant dense<0.000000e+00> : vector<128xf32>
    %53 = vector.multi_reduction <add>, %48, %cst_47 [0] : vector<32x128xf32> to vector<128xf32>
    %54 = vector.shape_cast %53 : vector<128xf32> to vector<1x128xf32>
    %cst_48 = arith.constant dense<0.000000e+00> : vector<1x8xf32>
    %55 = tpu.matmul %54, %49, %cst_48 {dimension_numbers = #tpu.dot_dimension_numbers<[1], [0], [0], [1], [0, 0, 1, 1], [], []>} : vector<1x128xf32>, vector<128x8xf32>, vector<1x8xf32> -> vector<1x8xf32>
    %cst_49 = arith.constant dense<0.000000e+00> : vector<1x128xf32>
    %56 = tpu.matmul %55, %50, %cst_49 {dimension_numbers = #tpu.dot_dimension_numbers<[1], [0], [0], [1], [0, 0, 1, 1], [], []>} : vector<1x8xf32>, vector<8x128xf32>, vector<1x128xf32> -> vector<1x128xf32>
    %cst_50 = arith.constant 0.001953125 : f32
    %57 = vector.broadcast %cst_50 : f32 to vector<1x128xf32>
    %58 = arith.mulf %56, %57 : vector<1x128xf32>
    %59 = vector.broadcast %58 : vector<1x128xf32> to vector<32x128xf32>
    %60 = arith.subf %48, %59 : vector<32x128xf32>
    %61 = arith.mulf %60, %60 : vector<32x128xf32>
    %cst_51 = arith.constant dense<0.000000e+00> : vector<128xf32>
    %62 = vector.multi_reduction <add>, %61, %cst_51 [0] : vector<32x128xf32> to vector<128xf32>
    %63 = vector.shape_cast %62 : vector<128xf32> to vector<1x128xf32>
    %cst_52 = arith.constant dense<0.000000e+00> : vector<1x8xf32>
    %64 = tpu.matmul %63, %49, %cst_52 {dimension_numbers = #tpu.dot_dimension_numbers<[1], [0], [0], [1], [0, 0, 1, 1], [], []>} : vector<1x128xf32>, vector<128x8xf32>, vector<1x8xf32> -> vector<1x8xf32>
    %cst_53 = arith.constant dense<0.000000e+00> : vector<1x128xf32>
    %65 = tpu.matmul %64, %50, %cst_53 {dimension_numbers = #tpu.dot_dimension_numbers<[1], [0], [0], [1], [0, 0, 1, 1], [], []>} : vector<1x8xf32>, vector<8x128xf32>, vector<1x128xf32> -> vector<1x128xf32>
    %cst_54 = arith.constant 0.001953125 : f32
    %66 = vector.broadcast %cst_54 : f32 to vector<1x128xf32>
    %67 = arith.mulf %65, %66 : vector<1x128xf32>
    %cst_55 = arith.constant 9.99999974E-6 : f32
    %68 = vector.broadcast %cst_55 : f32 to vector<1x128xf32>
    %69 = arith.addf %67, %68 : vector<1x128xf32>
    %70 = math.rsqrt %69 : vector<1x128xf32>
    %71 = arith.mulf %51, %70 : vector<1x128xf32>
    %72 = vector.broadcast %71 : vector<1x128xf32> to vector<32x128xf32>
    %73 = arith.mulf %60, %72 : vector<32x128xf32>
    %74 = vector.broadcast %52 : vector<1x128xf32> to vector<32x128xf32>
    %75 = arith.addf %73, %74 : vector<32x128xf32>
    %cst_56 = arith.constant 0.000000e+00 : f32
    %76 = vector.broadcast %cst_56 : f32 to vector<32x128xf32>
    %77 = arith.maximumf %75, %76 : vector<32x128xf32>
    %c0_57 = arith.constant 0 : index
    %c0_58 = arith.constant 0 : index
    %78 = vector.load %arg4[%c0_57, %c0_58] : memref<128x512xf32, #tpu.memory_space<vmem>>, vector<128x512xf32>
    %cst_59 = arith.constant dense<0.000000e+00> : vector<32x512xf32>
    %79 = tpu.matmul %77, %78, %cst_59 {dimension_numbers = #tpu.dot_dimension_numbers<[1], [0], [0], [1], [0, 0, 1, 1], [], []>} : vector<32x128xf32>, vector<128x512xf32>, vector<32x512xf32> -> vector<32x512xf32>
    %c0_60 = arith.constant 0 : index
    %c0_61 = arith.constant 0 : index
    %80 = vector.load %arg7[%c0_60, %c0_61] : memref<512x32xf32, #tpu.memory_space<vmem>>, vector<512x32xf32>
    %c0_62 = arith.constant 0 : index
    %c0_63 = arith.constant 0 : index
    %81 = vector.load %arg8[%c0_62, %c0_63] : memref<32x512xf32, #tpu.memory_space<vmem>>, vector<32x512xf32>
    %c0_64 = arith.constant 0 : index
    %c0_65 = arith.constant 0 : index
    %82 = vector.load %arg13[%c0_64, %c0_65] : memref<1x512xf32, #tpu.memory_space<vmem>>, vector<1x512xf32>
    %c0_66 = arith.constant 0 : index
    %c0_67 = arith.constant 0 : index
    %83 = vector.load %arg14[%c0_66, %c0_67] : memref<1x512xf32, #tpu.memory_space<vmem>>, vector<1x512xf32>
    %cst_68 = arith.constant dense<0.000000e+00> : vector<512xf32>
    %84 = vector.multi_reduction <add>, %79, %cst_68 [0] : vector<32x512xf32> to vector<512xf32>
    %85 = vector.shape_cast %84 : vector<512xf32> to vector<1x512xf32>
    %cst_69 = arith.constant dense<0.000000e+00> : vector<1x32xf32>
    %86 = tpu.matmul %85, %80, %cst_69 {dimension_numbers = #tpu.dot_dimension_numbers<[1], [0], [0], [1], [0, 0, 1, 1], [], []>} : vector<1x512xf32>, vector<512x32xf32>, vector<1x32xf32> -> vector<1x32xf32>
    %cst_70 = arith.constant dense<0.000000e+00> : vector<1x512xf32>
    %87 = tpu.matmul %86, %81, %cst_70 {dimension_numbers = #tpu.dot_dimension_numbers<[1], [0], [0], [1], [0, 0, 1, 1], [], []>} : vector<1x32xf32>, vector<32x512xf32>, vector<1x512xf32> -> vector<1x512xf32>
    %cst_71 = arith.constant 0.001953125 : f32
    %88 = vector.broadcast %cst_71 : f32 to vector<1x512xf32>
    %89 = arith.mulf %87, %88 : vector<1x512xf32>
    %90 = vector.broadcast %89 : vector<1x512xf32> to vector<32x512xf32>
    %91 = arith.subf %79, %90 : vector<32x512xf32>
    %92 = arith.mulf %91, %91 : vector<32x512xf32>
    %cst_72 = arith.constant dense<0.000000e+00> : vector<512xf32>
    %93 = vector.multi_reduction <add>, %92, %cst_72 [0] : vector<32x512xf32> to vector<512xf32>
    %94 = vector.shape_cast %93 : vector<512xf32> to vector<1x512xf32>
    %cst_73 = arith.constant dense<0.000000e+00> : vector<1x32xf32>
    %95 = tpu.matmul %94, %80, %cst_73 {dimension_numbers = #tpu.dot_dimension_numbers<[1], [0], [0], [1], [0, 0, 1, 1], [], []>} : vector<1x512xf32>, vector<512x32xf32>, vector<1x32xf32> -> vector<1x32xf32>
    %cst_74 = arith.constant dense<0.000000e+00> : vector<1x512xf32>
    %96 = tpu.matmul %95, %81, %cst_74 {dimension_numbers = #tpu.dot_dimension_numbers<[1], [0], [0], [1], [0, 0, 1, 1], [], []>} : vector<1x32xf32>, vector<32x512xf32>, vector<1x512xf32> -> vector<1x512xf32>
    %cst_75 = arith.constant 0.001953125 : f32
    %97 = vector.broadcast %cst_75 : f32 to vector<1x512xf32>
    %98 = arith.mulf %96, %97 : vector<1x512xf32>
    %cst_76 = arith.constant 9.99999974E-6 : f32
    %99 = vector.broadcast %cst_76 : f32 to vector<1x512xf32>
    %100 = arith.addf %98, %99 : vector<1x512xf32>
    %101 = math.rsqrt %100 : vector<1x512xf32>
    %102 = arith.mulf %82, %101 : vector<1x512xf32>
    %103 = vector.broadcast %102 : vector<1x512xf32> to vector<32x512xf32>
    %104 = arith.mulf %91, %103 : vector<32x512xf32>
    %105 = vector.broadcast %83 : vector<1x512xf32> to vector<32x512xf32>
    %106 = arith.addf %104, %105 : vector<32x512xf32>
    %107 = arith.addf %106, %0 : vector<32x512xf32>
    %cst_77 = arith.constant 0.000000e+00 : f32
    %108 = vector.broadcast %cst_77 : f32 to vector<32x512xf32>
    %109 = arith.maximumf %107, %108 : vector<32x512xf32>
    %c0_78 = arith.constant 0 : index
    %c0_79 = arith.constant 0 : index
    %110 = vector.load %arg15[%c0_78, %c0_79] : memref<32x512xf32, #tpu.memory_space<vmem>>, vector<32x512xf32>
    tpu.vector_store %arg15[%c0_78, %c0_79], %109 {strides = array<i32>} : memref<32x512xf32, #tpu.memory_space<vmem>>, vector<32x512xf32>,
    return
  }
}

</mosaic_0001>

<llo_original>
// kernel: tpu_custom_call.1
$region0: #{tpu_custom_call.1}
  #allocation0 [shape = 'u32[]', space=smem, size = 0x4, offset = 0x4, fixed_abs, tag = 'smem constant byte address 0x4 - core index']
  #allocation1 [shape = 'u32[72,128]{1,0:T(1,128)}', space=vmem, size = 0x9000, scoped, tag = 'internal scratch']
  %s0 = inlined_call_operand.vmem [shape: f32[32,512], index: 0, kind: input, shape index: {}]
  %s1 = inlined_call_operand.vmem [shape: f32[512,128], index: 1, kind: input, shape index: {}]
  %s2 = inlined_call_operand.hbm [shape: f32[3,128,128], index: 2, kind: input, shape index: {}]
  %s3 = inlined_call_operand.hbm [shape: f32[2,32,32], index: 3, kind: input, shape index: {}]
  %s4 = inlined_call_operand.hbm [shape: f32[128,512], index: 4, kind: input, shape index: {}]
  %s5 = inlined_call_operand.vmem [shape: f32[128,8], index: 5, kind: input, shape index: {}]
  %s6 = inlined_call_operand.vmem [shape: f32[8,128], index: 6, kind: input, shape index: {}]
  %s7 = inlined_call_operand.vmem [shape: f32[512,32], index: 7, kind: input, shape index: {}]
  %s8 = inlined_call_operand.hbm [shape: f32[32,512], index: 8, kind: input, shape index: {}]
  %s9 = inlined_call_operand.hbm [shape: f32[1,128], index: 9, kind: input, shape index: {}]
  %s10 = inlined_call_operand.hbm [shape: f32[1,128], index: 10, kind: input, shape index: {}]
  %s11 = inlined_call_operand.hbm [shape: f32[1,128], index: 11, kind: input, shape index: {}]
  %s12 = inlined_call_operand.hbm [shape: f32[1,128], index: 12, kind: input, shape index: {}]
  %s13 = inlined_call_operand.vmem [shape: f32[1,512], index: 13, kind: input, shape index: {}]
  %s14 = inlined_call_operand.vmem [shape: f32[1,512], index: 14, kind: input, shape index: {}]
  %s15 = inlined_call_operand.hbm [shape: f32[32,512], index: 15, kind: output, shape index: {}]
  %s16 = sld [smem:[#allocation0]]
  $region102: #{tpu_custom_call.1} parent=0
    _
  %s18 = ssub.s32 1, %s16
  %s19 = scalar_select 0, %s18, %s16
  $region1: #{tpu_custom_call.1} parent=0
    #allocation2 [shape = 'u8[196608]{0}', space=vmem, size = 0x30000, scoped, tag = 'input window, operand 2, single buffered']
    #allocation3 [shape = 's32[1]{0}', space=sflag, size = 0x4, scoped, tag = 'scoped memory for tpu_custom_call.1']
    #allocation4 [shape = 's32[1]{0}', space=sflag, size = 0x4, scoped, tag = 'scoped memory for tpu_custom_call.1']
    #allocation5 [shape = 'u8[32768]{0}', space=vmem, size = 0x8000, scoped, tag = 'input window, operand 3, single buffered']
    #allocation6 [shape = 's32[1]{0}', space=sflag, size = 0x4, scoped, tag = 'scoped memory for tpu_custom_call.1']
    #allocation7 [shape = 'u8[262144]{0}', space=vmem, size = 0x40000, scoped, tag = 'input window, operand 4, single buffered']
    #allocation8 [shape = 'u8[65536]{0}', space=vmem, size = 0x10000, scoped, tag = 'input window, operand 8, single buffered']
    #allocation9 [shape = 's32[1]{0}', space=sflag, size = 0x4, scoped, tag = 'scoped memory for tpu_custom_call.1']
    #allocation10 [shape = 'u8[512]{0}', space=vmem, size = 0x400, scoped, tag = 'input window, operand 9, single buffered']
    #allocation11 [shape = 'u8[512]{0}', space=vmem, size = 0x400, scoped, tag = 'input window, operand 10, single buffered']
    #allocation12 [shape = 's32[1]{0}', space=sflag, size = 0x4, scoped, tag = 'scoped memory for tpu_custom_call.1']
    #allocation13 [shape = 'u8[512]{0}', space=vmem, size = 0x400, scoped, tag = 'input window, operand 11, single buffered']
    #allocation14 [shape = 'u8[512]{0}', space=vmem, size = 0x400, scoped, tag = 'input window, operand 12, single buffered']
    #allocation15 [shape = 's32[1]{0}', space=sflag, size = 0x4, scoped, tag = 'scoped memory for tpu_custom_call.1']
    #allocation16 [shape = 'u8[65536]{0}', space=vmem, size = 0x10000, scoped, tag = 'output window, operand 0, single buffered']
    %20 = vsyncpa [#allocation3], 0
    %21 = vsyncpa [#allocation6], 0
    %22 = vsyncpa [#allocation9], 0
    %23 = vsyncpa [#allocation12], 0
    %24 = vsyncpa [#allocation15], 0
    %25 = vsyncpa [#allocation4], 0
    // Predicated region
    $region2: #{tpu_custom_call.1} parent=1 // pred_check
      _
    $region3: #{tpu_custom_call.1} parent=1 // pred_check_branch
      %27 = sbr.rel (0) target = $region5
    $region4: #{tpu_custom_call.1} parent=1 // pred_region
      _
    $region5: #{tpu_custom_call.1} parent=1 // pred_fallthru
      _
    // Predicated region
    $region6: #{tpu_custom_call.1} parent=1 // pred_check
      _
    $region7: #{tpu_custom_call.1} parent=1 // pred_check_branch
      %29 = sbr.rel (0) target = $region9
    $region8: #{tpu_custom_call.1} parent=1 // pred_region
      _
    $region9: #{tpu_custom_call.1} parent=1 // pred_fallthru
      _
    // Predicated region
    $region10: #{tpu_custom_call.1} parent=1 // pred_check
      _
    $region11: #{tpu_custom_call.1} parent=1 // pred_check_branch
      %31 = sbr.rel (0) target = $region13
    $region12: #{tpu_custom_call.1} parent=1 // pred_region
      %33 = vsyncadd [#allocation3], 0
      %s34 = sshll.u32 %s2, 4
      %s35 = int_to_ptr.hbm [resolvable:$true] %s34
      %s36 = sshll.u32 [#allocation2], 4
      %s37 = int_to_ptr.vmem [resolvable:$true] %s36
      %42 = dma.hbm_to_vmem [thread:$0]  %s35, 6144, %s37, [#allocation3], 128, 128, 8
    $region13: #{tpu_custom_call.1} parent=1 // pred_fallthru
      _
    // Predicated region
    $region14: #{tpu_custom_call.1} parent=1 // pred_check
      _
    $region15: #{tpu_custom_call.1} parent=1 // pred_check_branch
      %44 = sbr.rel (0) target = $region17
    $region16: #{tpu_custom_call.1} parent=1 // pred_region
      %46 = vsyncadd [#allocation6], 0
      %s47 = sshll.u32 %s3, 4
      %s48 = int_to_ptr.hbm [resolvable:$true] %s47
      %s49 = sshll.u32 [#allocation5], 4
      %s50 = int_to_ptr.vmem [resolvable:$true] %s49
      %55 = dma.hbm_to_vmem [thread:$0]  %s48, 1024, %s50, [#allocation6], 128, 128, 8
    $region17: #{tpu_custom_call.1} parent=1 // pred_fallthru
      _
    // Predicated region
    $region18: #{tpu_custom_call.1} parent=1 // pred_check
      _
    $region19: #{tpu_custom_call.1} parent=1 // pred_check_branch
      %57 = sbr.rel (0) target = $region21
    $region20: #{tpu_custom_call.1} parent=1 // pred_region
      %59 = vsyncadd [#allocation6], 0
      %s60 = sshll.u32 %s4, 4
      %s61 = int_to_ptr.hbm [resolvable:$true] %s60
      %s62 = sshll.u32 [#allocation7], 4
      %s63 = int_to_ptr.vmem [resolvable:$true] %s62
      %68 = dma.hbm_to_vmem [thread:$0]  %s61, 8192, %s63, [#allocation6], 512, 512, 32
    $region21: #{tpu_custom_call.1} parent=1 // pred_fallthru
      _
    // Predicated region
    $region22: #{tpu_custom_call.1} parent=1 // pred_check
      _
    $region23: #{tpu_custom_call.1} parent=1 // pred_check_branch
      %70 = sbr.rel (0) target = $region25
    $region24: #{tpu_custom_call.1} parent=1 // pred_region
      _
    $region25: #{tpu_custom_call.1} parent=1 // pred_fallthru
      _
    // Predicated region
    $region26: #{tpu_custom_call.1} parent=1 // pred_check
      _
    $region27: #{tpu_custom_call.1} parent=1 // pred_check_branch
      %72 = sbr.rel (0) target = $region29
    $region28: #{tpu_custom_call.1} parent=1 // pred_region
      _
    $region29: #{tpu_custom_call.1} parent=1 // pred_fallthru
      _
    // Predicated region
    $region30: #{tpu_custom_call.1} parent=1 // pred_check
      _
    $region31: #{tpu_custom_call.1} parent=1 // pred_check_branch
      %74 = sbr.rel (0) target = $region33
    $region32: #{tpu_custom_call.1} parent=1 // pred_region
      _
    $region33: #{tpu_custom_call.1} parent=1 // pred_fallthru
      _
    // Predicated region
    $region34: #{tpu_custom_call.1} parent=1 // pred_check
      _
    $region35: #{tpu_custom_call.1} parent=1 // pred_check_branch
      %76 = sbr.rel (0) target = $region37
    $region36: #{tpu_custom_call.1} parent=1 // pred_region
      %78 = vsyncadd [#allocation9], 0
      %s79 = sshll.u32 %s8, 4
      %s80 = int_to_ptr.hbm [resolvable:$true] %s79
      %s81 = sshll.u32 [#allocation8], 4
      %s82 = int_to_ptr.vmem [resolvable:$true] %s81
      %87 = dma.hbm_to_vmem [thread:$0]  %s80, 2048, %s82, [#allocation9], 512, 512, 32
    $region37: #{tpu_custom_call.1} parent=1 // pred_fallthru
      _
    // Predicated region
    $region38: #{tpu_custom_call.1} parent=1 // pred_check
      _
    $region39: #{tpu_custom_call.1} parent=1 // pred_check_branch
      %89 = sbr.rel (0) target = $region41
    $region40: #{tpu_custom_call.1} parent=1 // pred_region
      %91 = vsyncadd [#allocation9], 0
      %s93 = sshll.u32 %s9, 4
      %s94 = int_to_ptr.hbm [resolvable:$true] %s93
      %s95 = sshll.u32 [#allocation10], 4
      %s96 = int_to_ptr.vmem [resolvable:$true] %s95
      %98 = dma.hbm_to_vmem [thread:$0]  %s94, 16, %s96, [#allocation9]
    $region41: #{tpu_custom_call.1} parent=1 // pred_fallthru
      _
    // Predicated region
    $region42: #{tpu_custom_call.1} parent=1 // pred_check
      _
    $region43: #{tpu_custom_call.1} parent=1 // pred_check_branch
      %100 = sbr.rel (0) target = $region45
    $region44: #{tpu_custom_call.1} parent=1 // pred_region
      %102 = vsyncadd [#allocation12], 0
      %s104 = sshll.u32 %s10, 4
      %s105 = int_to_ptr.hbm [resolvable:$true] %s104
      %s106 = sshll.u32 [#allocation11], 4
      %s107 = int_to_ptr.vmem [resolvable:$true] %s106
      %109 = dma.hbm_to_vmem [thread:$0]  %s105, 16, %s107, [#allocation12]
    $region45: #{tpu_custom_call.1} parent=1 // pred_fallthru
      _
    // Predicated region
    $region46: #{tpu_custom_call.1} parent=1 // pred_check
      _
    $region47: #{tpu_custom_call.1} parent=1 // pred_check_branch
      %111 = sbr.rel (0) target = $region49
    $region48: #{tpu_custom_call.1} parent=1 // pred_region
      %113 = vsyncadd [#allocation12], 0
      %s115 = sshll.u32 %s11, 4
      %s116 = int_to_ptr.hbm [resolvable:$true] %s115
      %s117 = sshll.u32 [#allocation13], 4
      %s118 = int_to_ptr.vmem [resolvable:$true] %s117
      %120 = dma.hbm_to_vmem [thread:$0]  %s116, 16, %s118, [#allocation12]
    $region49: #{tpu_custom_call.1} parent=1 // pred_fallthru
      _
    // Predicated region
    $region50: #{tpu_custom_call.1} parent=1 // pred_check
      _
    $region51: #{tpu_custom_call.1} parent=1 // pred_check_branch
      %122 = sbr.rel (0) target = $region53
    $region52: #{tpu_custom_call.1} parent=1 // pred_region
      %124 = vsyncadd [#allocation15], 0
      %s126 = sshll.u32 %s12, 4
      %s127 = int_to_ptr.hbm [resolvable:$true] %s126
      %s128 = sshll.u32 [#allocation14], 4
      %s129 = int_to_ptr.vmem [resolvable:$true] %s128
      %131 = dma.hbm_to_vmem [thread:$0]  %s127, 16, %s129, [#allocation15]
    $region53: #{tpu_custom_call.1} parent=1 // pred_fallthru
      _
    // Predicated region
    $region54: #{tpu_custom_call.1} parent=1 // pred_check
      _
    $region55: #{tpu_custom_call.1} parent=1 // pred_check_branch
      %133 = sbr.rel (0) target = $region57
    $region56: #{tpu_custom_call.1} parent=1 // pred_region
      _
    $region57: #{tpu_custom_call.1} parent=1 // pred_fallthru
      _
    // Predicated region
    $region58: #{tpu_custom_call.1} parent=1 // pred_check
      _
    $region59: #{tpu_custom_call.1} parent=1 // pred_check_branch
      %135 = sbr.rel (0) target = $region61
    $region60: #{tpu_custom_call.1} parent=1 // pred_region
      _
    $region61: #{tpu_custom_call.1} parent=1 // pred_fallthru
      _
    // Predicated region
    $region62: #{tpu_custom_call.1} parent=1 // pred_check
      _
    $region63: #{tpu_custom_call.1} parent=1 // pred_check_branch
      %137 = sbr.rel (0) target = $region65
    $region64: #{tpu_custom_call.1} parent=1 // pred_region
      %139 = dma.done [#allocation3], 6144
    $region65: #{tpu_custom_call.1} parent=1 // pred_fallthru
      _
    // Predicated region
    $region66: #{tpu_custom_call.1} parent=1 // pred_check
      _
    $region67: #{tpu_custom_call.1} parent=1 // pred_check_branch
      %141 = sbr.rel (0) target = $region69
    $region68: #{tpu_custom_call.1} parent=1 // pred_region
      %143 = dma.done [#allocation6], 1024
    $region69: #{tpu_custom_call.1} parent=1 // pred_fallthru
      _
    // Predicated region
    $region70: #{tpu_custom_call.1} parent=1 // pred_check
      _
    $region71: #{tpu_custom_call.1} parent=1 // pred_check_branch
      %145 = sbr.rel (0) target = $region73
    $region72: #{tpu_custom_call.1} parent=1 // pred_region
      %147 = dma.done [#allocation6], 8192
    $region73: #{tpu_custom_call.1} parent=1 // pred_fallthru
      _
    // Predicated region
    $region74: #{tpu_custom_call.1} parent=1 // pred_check
      _
    $region75: #{tpu_custom_call.1} parent=1 // pred_check_branch
      %149 = sbr.rel (0) target = $region77
    $region76: #{tpu_custom_call.1} parent=1 // pred_region
      %151 = dma.done [#allocation9], 2048
    $region77: #{tpu_custom_call.1} parent=1 // pred_fallthru
      _
    // Predicated region
    $region78: #{tpu_custom_call.1} parent=1 // pred_check
      _
    $region79: #{tpu_custom_call.1} parent=1 // pred_check_branch
      %153 = sbr.rel (0) target = $region81
    $region80: #{tpu_custom_call.1} parent=1 // pred_region
      %155 = dma.done [#allocation9], 16
    $region81: #{tpu_custom_call.1} parent=1 // pred_fallthru
      _
    // Predicated region
    $region82: #{tpu_custom_call.1} parent=1 // pred_check
      _
    $region83: #{tpu_custom_call.1} parent=1 // pred_check_branch
      %157 = sbr.rel (0) target = $region85
    $region84: #{tpu_custom_call.1} parent=1 // pred_region
      %159 = dma.done [#allocation12], 16
    $region85: #{tpu_custom_call.1} parent=1 // pred_fallthru
      _
    // Predicated region
    $region86: #{tpu_custom_call.1} parent=1 // pred_check
      _
    $region87: #{tpu_custom_call.1} parent=1 // pred_check_branch
      %161 = sbr.rel (0) target = $region89
    $region88: #{tpu_custom_call.1} parent=1 // pred_region
      %163 = dma.done [#allocation12], 16
    $region89: #{tpu_custom_call.1} parent=1 // pred_fallthru
      _
    // Predicated region
    $region90: #{tpu_custom_call.1} parent=1 // pred_check
      _
    $region91: #{tpu_custom_call.1} parent=1 // pred_check_branch
      %165 = sbr.rel (0) target = $region93
    $region92: #{tpu_custom_call.1} parent=1 // pred_region
      %167 = dma.done [#allocation15], 16
    $region93: #{tpu_custom_call.1} parent=1 // pred_fallthru
      _
    %v168 = vld [vmem:[%s0] sm:$0xff]
    %v169 = vld [vmem:[%s0 + $0x8] sm:$0xff]
    %v170 = vld [vmem:[%s0 + $0x10] sm:$0xff]
    %v171 = vld [vmem:[%s0 + $0x18] sm:$0xff]
    %v172 = vld [vmem:[%s0 + $0x20] sm:$0xff]
    %v173 = vld [vmem:[%s0 + $0x28] sm:$0xff]
    %v174 = vld [vmem:[%s0 + $0x30] sm:$0xff]
    %v175 = vld [vmem:[%s0 + $0x38] sm:$0xff]
    %v176 = vld [vmem:[%s0 + $0x40] sm:$0xff]
    %v177 = vld [vmem:[%s0 + $0x48] sm:$0xff]
    %v178 = vld [vmem:[%s0 + $0x50] sm:$0xff]
    %v179 = vld [vmem:[%s0 + $0x58] sm:$0xff]
    %v180 = vld [vmem:[%s0 + $0x60] sm:$0xff]
    %v181 = vld [vmem:[%s0 + $0x68] sm:$0xff]
    %v182 = vld [vmem:[%s0 + $0x70] sm:$0xff]
    %v183 = vld [vmem:[%s0 + $0x78] sm:$0xff]
    %v184 = vld [vmem:[%s1] sm:$0xff]
    %v185 = vld [vmem:[%s1 + $0x8] sm:$0xff]
    %v186 = vld [vmem:[%s1 + $0x10] sm:$0xff]
    %v187 = vld [vmem:[%s1 + $0x18] sm:$0xff]
    %v188 = vld [vmem:[%s1 + $0x20] sm:$0xff]
    %v189 = vld [vmem:[%s1 + $0x28] sm:$0xff]
    %v190 = vld [vmem:[%s1 + $0x30] sm:$0xff]
    %v191 = vld [vmem:[%s1 + $0x38] sm:$0xff]
    %v192 = vld [vmem:[%s1 + $0x40] sm:$0xff]
    %v193 = vld [vmem:[%s1 + $0x48] sm:$0xff]
    %v194 = vld [vmem:[%s1 + $0x50] sm:$0xff]
    %v195 = vld [vmem:[%s1 + $0x58] sm:$0xff]
    %v196 = vld [vmem:[%s1 + $0x60] sm:$0xff]
    %v197 = vld [vmem:[%s1 + $0x68] sm:$0xff]
    %v198 = vld [vmem:[%s1 + $0x70] sm:$0xff]
    %v199 = vld [vmem:[%s1 + $0x78] sm:$0xff]
    %v200 = vld [vmem:[%s1 + $0x80] sm:$0xff]
    %v201 = vld [vmem:[%s1 + $0x88] sm:$0xff]
    %v202 = vld [vmem:[%s1 + $0x90] sm:$0xff]
    %v203 = vld [vmem:[%s1 + $0x98] sm:$0xff]
    %v204 = vld [vmem:[%s1 + $0xa0] sm:$0xff]
    %v205 = vld [vmem:[%s1 + $0xa8] sm:$0xff]
    %v206 = vld [vmem:[%s1 + $0xb0] sm:$0xff]
    %v207 = vld [vmem:[%s1 + $0xb8] sm:$0xff]
    %v208 = vld [vmem:[%s1 + $0xc0] sm:$0xff]
    %v209 = vld [vmem:[%s1 + $0xc8] sm:$0xff]
    %v210 = vld [vmem:[%s1 + $0xd0] sm:$0xff]
    %v211 = vld [vmem:[%s1 + $0xd8] sm:$0xff]
    %v212 = vld [vmem:[%s1 + $0xe0] sm:$0xff]
    %v213 = vld [vmem:[%s1 + $0xe8] sm:$0xff]
    %v214 = vld [vmem:[%s1 + $0xf0] sm:$0xff]
    %v215 = vld [vmem:[%s1 + $0xf8] sm:$0xff]
    %v216 = vld [vmem:[%s1 + $0x100] sm:$0xff]
    %v217 = vld [vmem:[%s1 + $0x108] sm:$0xff]
    %v218 = vld [vmem:[%s1 + $0x110] sm:$0xff]
    %v219 = vld [vmem:[%s1 + $0x118] sm:$0xff]
    %v220 = vld [vmem:[%s1 + $0x120] sm:$0xff]
    %v221 = vld [vmem:[%s1 + $0x128] sm:$0xff]
    %v222 = vld [vmem:[%s1 + $0x130] sm:$0xff]
    %v223 = vld [vmem:[%s1 + $0x138] sm:$0xff]
    %v224 = vld [vmem:[%s1 + $0x140] sm:$0xff]
    %v225 = vld [vmem:[%s1 + $0x148] sm:$0xff]
    %v226 = vld [vmem:[%s1 + $0x150] sm:$0xff]
    %v227 = vld [vmem:[%s1 + $0x158] sm:$0xff]
    %v228 = vld [vmem:[%s1 + $0x160] sm:$0xff]
    %v229 = vld [vmem:[%s1 + $0x168] sm:$0xff]
    %v230 = vld [vmem:[%s1 + $0x170] sm:$0xff]
    %v231 = vld [vmem:[%s1 + $0x178] sm:$0xff]
    %v232 = vld [vmem:[%s1 + $0x180] sm:$0xff]
    %v233 = vld [vmem:[%s1 + $0x188] sm:$0xff]
    %v234 = vld [vmem:[%s1 + $0x190] sm:$0xff]
    %v235 = vld [vmem:[%s1 + $0x198] sm:$0xff]
    %v236 = vld [vmem:[%s1 + $0x1a0] sm:$0xff]
    %v237 = vld [vmem:[%s1 + $0x1a8] sm:$0xff]
    %v238 = vld [vmem:[%s1 + $0x1b0] sm:$0xff]
    %v239 = vld [vmem:[%s1 + $0x1b8] sm:$0xff]
    %v240 = vld [vmem:[%s1 + $0x1c0] sm:$0xff]
    %v241 = vld [vmem:[%s1 + $0x1c8] sm:$0xff]
    %v242 = vld [vmem:[%s1 + $0x1d0] sm:$0xff]
    %v243 = vld [vmem:[%s1 + $0x1d8] sm:$0xff]
    %v244 = vld [vmem:[%s1 + $0x1e0] sm:$0xff]
    %v245 = vld [vmem:[%s1 + $0x1e8] sm:$0xff]
    %v246 = vld [vmem:[%s1 + $0x1f0] sm:$0xff]
    %v247 = vld [vmem:[%s1 + $0x1f8] sm:$0xff]
    %248 = vmatpush.msra.mxu0 %v199
    %249 = vmatpush.msra.mxu0 %v198
    %250 = vmatpush.msra.mxu0 %v197
    %251 = vmatpush.msra.mxu0 %v196
    %252 = vmatpush.msra.mxu0 %v195
    %253 = vmatpush.msra.mxu0 %v194
    %254 = vmatpush.msra.mxu0 %v193
    %255 = vmatpush.msra.mxu0 %v192
    %256 = vmatpush.msra.mxu0 %v191
    %257 = vmatpush.msra.mxu0 %v190
    %258 = vmatpush.msra.mxu0 %v189
    %259 = vmatpush.msra.mxu0 %v188
    %260 = vmatpush.msra.mxu0 %v187
    %261 = vmatpush.msra.mxu0 %v186
    %262 = vmatpush.msra.mxu0 %v185
    %263 = vmatpush.msra.mxu0 %v184
    %264 = vmatmul.f32.gmra.mxu0 %v168
    %v265 = vpop.f32.mrf.mxu0
    %v266 = vadd.f32 0.0, %v265
    %267 = vmatmul.f32.gmra.mxu0 %v172
    %v268 = vpop.f32.mrf.mxu0
    %v269 = vadd.f32 0.0, %v268
    %270 = vmatmul.f32.gmra.mxu0 %v176
    %v271 = vpop.f32.mrf.mxu0
    %v272 = vadd.f32 0.0, %v271
    %273 = vmatmul.f32.gmra.mxu0 %v180
    %v274 = vpop.f32.mrf.mxu0
    %v275 = vadd.f32 0.0, %v274
    %276 = vdwg.mxu0
    %277 = vmatpush.msra.mxu0 %v215
    %278 = vmatpush.msra.mxu0 %v214
    %279 = vmatpush.msra.mxu0 %v213
    %280 = vmatpush.msra.mxu0 %v212
    %281 = vmatpush.msra.mxu0 %v211
    %282 = vmatpush.msra.mxu0 %v210
    %283 = vmatpush.msra.mxu0 %v209
    %284 = vmatpush.msra.mxu0 %v208
    %285 = vmatpush.msra.mxu0 %v207
    %286 = vmatpush.msra.mxu0 %v206
    %287 = vmatpush.msra.mxu0 %v205
    %288 = vmatpush.msra.mxu0 %v204
    %289 = vmatpush.msra.mxu0 %v203
    %290 = vmatpush.msra.mxu0 %v202
    %291 = vmatpush.msra.mxu0 %v201
    %292 = vmatpush.msra.mxu0 %v200
    %293 = vmatmul.f32.gmra.mxu0 %v169
    %v294 = vpop.f32.mrf.mxu0
    %v295 = vadd.f32 %v266, %v294
    %296 = vmatmul.f32.gmra.mxu0 %v173
    %v297 = vpop.f32.mrf.mxu0
    %v298 = vadd.f32 %v269, %v297
    %299 = vmatmul.f32.gmra.mxu0 %v177
    %v300 = vpop.f32.mrf.mxu0
    %v301 = vadd.f32 %v272, %v300
    %302 = vmatmul.f32.gmra.mxu0 %v181
    %v303 = vpop.f32.mrf.mxu0
    %v304 = vadd.f32 %v275, %v303
    %305 = vdwg.mxu0
    %306 = vmatpush.msra.mxu0 %v231
    %307 = vmatpush.msra.mxu0 %v230
    %308 = vmatpush.msra.mxu0 %v229
    %309 = vmatpush.msra.mxu0 %v228
    %310 = vmatpush.msra.mxu0 %v227
    %311 = vmatpush.msra.mxu0 %v226
    %312 = vmatpush.msra.mxu0 %v225
    %313 = vmatpush.msra.mxu0 %v224
    %314 = vmatpush.msra.mxu0 %v223
    %315 = vmatpush.msra.mxu0 %v222
    %316 = vmatpush.msra.mxu0 %v221
    %317 = vmatpush.msra.mxu0 %v220
    %318 = vmatpush.msra.mxu0 %v219
    %319 = vmatpush.msra.mxu0 %v218
    %320 = vmatpush.msra.mxu0 %v217
    %321 = vmatpush.msra.mxu0 %v216
    %322 = vmatmul.f32.gmra.mxu0 %v170
    %v323 = vpop.f32.mrf.mxu0
    %v324 = vadd.f32 %v295, %v323
    %325 = vmatmul.f32.gmra.mxu0 %v174
    %v326 = vpop.f32.mrf.mxu0
    %v327 = vadd.f32 %v298, %v326
    %328 = vmatmul.f32.gmra.mxu0 %v178
    %v329 = vpop.f32.mrf.mxu0
    %v330 = vadd.f32 %v301, %v329
    %331 = vmatmul.f32.gmra.mxu0 %v182
    %v332 = vpop.f32.mrf.mxu0
    %v333 = vadd.f32 %v304, %v332
    %334 = vdwg.mxu0
    %335 = vmatpush.msra.mxu0 %v247
    %336 = vmatpush.msra.mxu0 %v246
    %337 = vmatpush.msra.mxu0 %v245
    %338 = vmatpush.msra.mxu0 %v244
    %339 = vmatpush.msra.mxu0 %v243
    %340 = vmatpush.msra.mxu0 %v242
    %341 = vmatpush.msra.mxu0 %v241
    %342 = vmatpush.msra.mxu0 %v240
    %343 = vmatpush.msra.mxu0 %v239
    %344 = vmatpush.msra.mxu0 %v238
    %345 = vmatpush.msra.mxu0 %v237
    %346 = vmatpush.msra.mxu0 %v236
    %347 = vmatpush.msra.mxu0 %v235
    %348 = vmatpush.msra.mxu0 %v234
    %349 = vmatpush.msra.mxu0 %v233
    %350 = vmatpush.msra.mxu0 %v232
    %351 = vmatmul.f32.gmra.mxu0 %v171
    %v352 = vpop.f32.mrf.mxu0
    %v353 = vadd.f32 %v324, %v352
    %354 = vmatmul.f32.gmra.mxu0 %v175
    %v355 = vpop.f32.mrf.mxu0
    %v356 = vadd.f32 %v327, %v355
    %357 = vmatmul.f32.gmra.mxu0 %v179
    %v358 = vpop.f32.mrf.mxu0
    %v359 = vadd.f32 %v330, %v358
    %360 = vmatmul.f32.gmra.mxu0 %v183
    %v361 = vpop.f32.mrf.mxu0
    %v362 = vadd.f32 %v333, %v361
    %363 = vdwg.mxu0
    %v364 = vld [vmem:[%s5] sm:$0xff]
    %v365 = vld [vmem:[%s5 + $0x8] sm:$0xff]
    %v366 = vld [vmem:[%s5 + $0x10] sm:$0xff]
    %v367 = vld [vmem:[%s5 + $0x18] sm:$0xff]
    %v368 = vld [vmem:[%s5 + $0x20] sm:$0xff]
    %v369 = vld [vmem:[%s5 + $0x28] sm:$0xff]
    %v370 = vld [vmem:[%s5 + $0x30] sm:$0xff]
    %v371 = vld [vmem:[%s5 + $0x38] sm:$0xff]
    %v372 = vld [vmem:[%s5 + $0x40] sm:$0xff]
    %v373 = vld [vmem:[%s5 + $0x48] sm:$0xff]
    %v374 = vld [vmem:[%s5 + $0x50] sm:$0xff]
    %v375 = vld [vmem:[%s5 + $0x58] sm:$0xff]
    %v376 = vld [vmem:[%s5 + $0x60] sm:$0xff]
    %v377 = vld [vmem:[%s5 + $0x68] sm:$0xff]
    %v378 = vld [vmem:[%s5 + $0x70] sm:$0xff]
    %v379 = vld [vmem:[%s5 + $0x78] sm:$0xff]
    %v380 = vld [vmem:[%s6] sm:$0xff]
    %v381 = vld [vmem:[#allocation10] sm:$0x1]
    %v382 = vld [vmem:[#allocation11] sm:$0x1]
    %v383 = vadd.f32 %v353, %v356
    %v384 = vadd.f32 %v383, %v359
    %v385 = vadd.f32 %v384, %v362
    %v386 = vrot.slane %v385, 4
    %v387 = vadd.f32 %v385, %v386
    %v388 = vrot.slane %v387, 2
    %v389 = vadd.f32 %v387, %v388
    %v390 = vrot.slane %v389, 1
    %v391 = vadd.f32 %v389, %v390
    %392 = vmatpush.msra.mxu0 %v379
    %393 = vmatpush.msra.mxu0 %v378
    %394 = vmatpush.msra.mxu0 %v377
    %395 = vmatpush.msra.mxu0 %v376
    %396 = vmatpush.msra.mxu0 %v375
    %397 = vmatpush.msra.mxu0 %v374
    %398 = vmatpush.msra.mxu0 %v373
    %399 = vmatpush.msra.mxu0 %v372
    %400 = vmatpush.msra.mxu0 %v371
    %401 = vmatpush.msra.mxu0 %v370
    %402 = vmatpush.msra.mxu0 %v369
    %403 = vmatpush.msra.mxu0 %v368
    %404 = vmatpush.msra.mxu0 %v367
    %405 = vmatpush.msra.mxu0 %v366
    %406 = vmatpush.msra.mxu0 %v365
    %407 = vmatpush.msra.mxu0 %v364
    %408 = vmatmul.f32.gmra.mxu0 %v391
    %v409 = vpop.f32.mrf.mxu0
    %v410 = vadd.f32 0.0, %v409
    %411 = vdwg.mxu0
    %vm412 = vcmask 64512
    %v414 = vsel %vm412, %v410, 0
    %416 = vmatpush.msra.mxu0 0.0
    %417 = vmatpush.msra.mxu0 0.0
    %418 = vmatpush.msra.mxu0 0.0
    %419 = vmatpush.msra.mxu0 0.0
    %420 = vmatpush.msra.mxu0 0.0
    %421 = vmatpush.msra.mxu0 0.0
    %422 = vmatpush.msra.mxu0 0.0
    %423 = vmatpush.msra.mxu0 0.0
    %424 = vmatpush.msra.mxu0 0.0
    %425 = vmatpush.msra.mxu0 0.0
    %426 = vmatpush.msra.mxu0 0.0
    %427 = vmatpush.msra.mxu0 0.0
    %428 = vmatpush.msra.mxu0 0.0
    %429 = vmatpush.msra.mxu0 0.0
    %430 = vmatpush.msra.mxu0 0.0
    %431 = vmatpush.msra.mxu0 %v380
    %432 = vmatmul.f32.gmra.mxu0 %v414
    %v433 = vpop.f32.mrf.mxu0
    %v434 = vadd.f32 0.0, %v433
    %435 = vdwg.mxu0
    %v436 = vmul.f32 %v434, 0.001953125
    %v437 = vperm.slane %v436, 0
    %v438 = vsub.f32 %v353, %v437
    %v439 = vsub.f32 %v356, %v437
    %v440 = vsub.f32 %v359, %v437
    %v441 = vsub.f32 %v362, %v437
    %v442 = vmul.f32 %v438, %v438
    %v443 = vmul.f32 %v439, %v439
    %v444 = vmul.f32 %v440, %v440
    %v445 = vmul.f32 %v441, %v441
    %v446 = vadd.f32 %v442, %v443
    %v447 = vadd.f32 %v446, %v444
    %v448 = vadd.f32 %v447, %v445
    %v449 = vrot.slane %v448, 4
    %v450 = vadd.f32 %v448, %v449
    %v451 = vrot.slane %v450, 2
    %v452 = vadd.f32 %v450, %v451
    %v453 = vrot.slane %v452, 1
    %v454 = vadd.f32 %v452, %v453
    %455 = vmatpush.msra.mxu0 %v379
    %456 = vmatpush.msra.mxu0 %v378
    %457 = vmatpush.msra.mxu0 %v377
    %458 = vmatpush.msra.mxu0 %v376
    %459 = vmatpush.msra.mxu0 %v375
    %460 = vmatpush.msra.mxu0 %v374
    %461 = vmatpush.msra.mxu0 %v373
    %462 = vmatpush.msra.mxu0 %v372
    %463 = vmatpush.msra.mxu0 %v371
    %464 = vmatpush.msra.mxu0 %v370
    %465 = vmatpush.msra.mxu0 %v369
    %466 = vmatpush.msra.mxu0 %v368
    %467 = vmatpush.msra.mxu0 %v367
    %468 = vmatpush.msra.mxu0 %v366
    %469 = vmatpush.msra.mxu0 %v365
    %470 = vmatpush.msra.mxu0 %v364
    %471 = vmatmul.f32.gmra.mxu0 %v454
    %v472 = vpop.f32.mrf.mxu0
    %v473 = vadd.f32 0.0, %v472
    %474 = vdwg.mxu0
    %v476 = vsel %vm412, %v473, 0
    %478 = vmatpush.msra.mxu0 0.0
    %479 = vmatpush.msra.mxu0 0.0
    %480 = vmatpush.msra.mxu0 0.0
    %481 = vmatpush.msra.mxu0 0.0
    %482 = vmatpush.msra.mxu0 0.0
    %483 = vmatpush.msra.mxu0 0.0
    %484 = vmatpush.msra.mxu0 0.0
    %485 = vmatpush.msra.mxu0 0.0
    %486 = vmatpush.msra.mxu0 0.0
    %487 = vmatpush.msra.mxu0 0.0
    %488 = vmatpush.msra.mxu0 0.0
    %489 = vmatpush.msra.mxu0 0.0
    %490 = vmatpush.msra.mxu0 0.0
    %491 = vmatpush.msra.mxu0 0.0
    %492 = vmatpush.msra.mxu0 0.0
    %493 = vmatpush.msra.mxu0 %v380
    %494 = vmatmul.f32.gmra.mxu0 %v476
    %v495 = vpop.f32.mrf.mxu0
    %v496 = vadd.f32 0.0, %v495
    %497 = vdwg.mxu0
    %v498 = vmul.f32 %v496, 0.001953125
    %v499 = vadd.f32 %v498, 1e-05
    %v500 = vrsqrt.pop %v499
    %v501 = vmul.f32 %v500, %v499
    %v502 = vmul.f32 %v501, %v500
    %v503 = vmul.f32 0.5, %v502
    %v504 = vsub.f32 1.5, %v503
    %v505 = vmul.f32 %v500, %v504
    %vm506 = vweird.f32 %v499
    %vm507 = vweird.f32 %v500
    %vm508 = vmor %vm506, %vm507
    %v509 = vsel %vm508, %v500, %v505
    %v510 = vmul.f32 %v381, %v509
    %v512 = vperm.slane %v510, 0
    %v514 = vmul.f32 %v438, %v512
    %v515 = vmul.f32 %v439, %v512
    %v516 = vmul.f32 %v440, %v512
    %v517 = vmul.f32 %v441, %v512
    %v519 = vperm.slane %v382, 0
    %v521 = vadd.f32 %v514, %v519
    %v522 = vadd.f32 %v515, %v519
    %v523 = vadd.f32 %v516, %v519
    %v524 = vadd.f32 %v517, %v519
    %v525 = vmax.f32 %v521, 0.0
    %v526 = vmax.f32 %v522, 0.0
    %v527 = vmax.f32 %v523, 0.0
    %v528 = vmax.f32 %v524, 0.0
    %s529 = scalar_lea.vmem [#allocation2], 128
    %v530 = vld [vmem:[%s529] sm:$0xff]
    %v531 = vld [vmem:[%s529 + $0x8] sm:$0xff]
    %v532 = vld [vmem:[%s529 + $0x10] sm:$0xff]
    %v533 = vld [vmem:[%s529 + $0x18] sm:$0xff]
    %v534 = vld [vmem:[%s529 + $0x20] sm:$0xff]
    %v535 = vld [vmem:[%s529 + $0x28] sm:$0xff]
    %v536 = vld [vmem:[%s529 + $0x30] sm:$0xff]
    %v537 = vld [vmem:[%s529 + $0x38] sm:$0xff]
    %v538 = vld [vmem:[%s529 + $0x40] sm:$0xff]
    %v539 = vld [vmem:[%s529 + $0x48] sm:$0xff]
    %v540 = vld [vmem:[%s529 + $0x50] sm:$0xff]
    %v541 = vld [vmem:[%s529 + $0x58] sm:$0xff]
    %v542 = vld [vmem:[%s529 + $0x60] sm:$0xff]
    %v543 = vld [vmem:[%s529 + $0x68] sm:$0xff]
    %v544 = vld [vmem:[%s529 + $0x70] sm:$0xff]
    %v545 = vld [vmem:[%s529 + $0x78] sm:$0xff]
    %v546 = vld [vmem:[#allocation5] sm:$0xff]
    %v547 = vld [vmem:[#allocation5 + $0x8] sm:$0xff]
    %v548 = vld [vmem:[#allocation5 + $0x10] sm:$0xff]
    %v549 = vld [vmem:[#allocation5 + $0x18] sm:$0xff]
    %vm550 = vcmask 261120
    %v552 = vsel %vm550, %v546, 0
    %v555 = vsel %vm550, %v547, 0
    %v558 = vsel %vm550, %v548, 0
    %v561 = vsel %vm550, %v549, 0
    %563 = vmatpush.msra.mxu0 0.0
    %564 = vmatpush.msra.mxu0 0.0
    %565 = vmatpush.msra.mxu0 0.0
    %566 = vmatpush.msra.mxu0 0.0
    %567 = vmatpush.msra.mxu0 0.0
    %568 = vmatpush.msra.mxu0 0.0
    %569 = vmatpush.msra.mxu0 0.0
    %570 = vmatpush.msra.mxu0 0.0
    %571 = vmatpush.msra.mxu0 0.0
    %572 = vmatpush.msra.mxu0 0.0
    %573 = vmatpush.msra.mxu0 0.0
    %574 = vmatpush.msra.mxu0 0.0
    %575 = vmatpush.msra.mxu0 %v528
    %576 = vmatpush.msra.mxu0 %v527
    %577 = vmatpush.msra.mxu0 %v526
    %578 = vmatpush.msra.mxu0 %v525
    %579 = vmatmul.f32.gmra.mxu0 %v552
    %v580 = vpop.f32.mrf.mxu0
    %v581 = vadd.f32 0.0, %v580
    %582 = vmatmul.f32.gmra.mxu0 %v555
    %v583 = vpop.f32.mrf.mxu0
    %v584 = vadd.f32 0.0, %v583
    %585 = vmatmul.f32.gmra.mxu0 %v558
    %v586 = vpop.f32.mrf.mxu0
    %v587 = vadd.f32 0.0, %v586
    %588 = vmatmul.f32.gmra.mxu0 %v561
    %v589 = vpop.f32.mrf.mxu0
    %v590 = vadd.f32 0.0, %v589
    %591 = vdwg.mxu0
    %v592 = vld [vmem:[#allocation2] sm:$0xff]
    %v593 = vld [vmem:[#allocation2 + $0x8] sm:$0xff]
    %v594 = vld [vmem:[#allocation2 + $0x10] sm:$0xff]
    %v595 = vld [vmem:[#allocation2 + $0x18] sm:$0xff]
    %v596 = vld [vmem:[#allocation2 + $0x20] sm:$0xff]
    %v597 = vld [vmem:[#allocation2 + $0x28] sm:$0xff]
    %v598 = vld [vmem:[#allocation2 + $0x30] sm:$0xff]
    %v599 = vld [vmem:[#allocation2 + $0x38] sm:$0xff]
    %v600 = vld [vmem:[#allocation2 + $0x40] sm:$0xff]
    %v601 = vld [vmem:[#allocation2 + $0x48] sm:$0xff]
    %v602 = vld [vmem:[#allocation2 + $0x50] sm:$0xff]
    %v603 = vld [vmem:[#allocation2 + $0x58] sm:$0xff]
    %v604 = vld [vmem:[#allocation2 + $0x60] sm:$0xff]
    %v605 = vld [vmem:[#allocation2 + $0x68] sm:$0xff]
    %v606 = vld [vmem:[#allocation2 + $0x70] sm:$0xff]
    %v607 = vld [vmem:[#allocation2 + $0x78] sm:$0xff]
    %608 = vmatpush.msra.mxu0 %v607
    %609 = vmatpush.msra.mxu0 %v606
    %610 = vmatpush.msra.mxu0 %v605
    %611 = vmatpush.msra.mxu0 %v604
    %612 = vmatpush.msra.mxu0 %v603
    %613 = vmatpush.msra.mxu0 %v602
    %614 = vmatpush.msra.mxu0 %v601
    %615 = vmatpush.msra.mxu0 %v600
    %616 = vmatpush.msra.mxu0 %v599
    %617 = vmatpush.msra.mxu0 %v598
    %618 = vmatpush.msra.mxu0 %v597
    %619 = vmatpush.msra.mxu0 %v596
    %620 = vmatpush.msra.mxu0 %v595
    %621 = vmatpush.msra.mxu0 %v594
    %622 = vmatpush.msra.mxu0 %v593
    %623 = vmatpush.msra.mxu0 %v592
    %624 = vmatmul.f32.gmra.mxu0 %v581
    %v625 = vpop.f32.mrf.mxu0
    %v626 = vadd.f32 0.0, %v625
    %627 = vmatmul.f32.gmra.mxu0 %v584
    %v628 = vpop.f32.mrf.mxu0
    %v629 = vadd.f32 0.0, %v628
    %630 = vmatmul.f32.gmra.mxu0 %v587
    %v631 = vpop.f32.mrf.mxu0
    %v632 = vadd.f32 0.0, %v631
    %633 = vmatmul.f32.gmra.mxu0 %v590
    %v634 = vpop.f32.mrf.mxu0
    %v635 = vadd.f32 0.0, %v634
    %636 = vdwg.mxu0
    %637 = vmatpush.msra.mxu0 %v545
    %638 = vmatpush.msra.mxu0 %v544
    %639 = vmatpush.msra.mxu0 %v543
    %640 = vmatpush.msra.mxu0 %v542
    %641 = vmatpush.msra.mxu0 %v541
    %642 = vmatpush.msra.mxu0 %v540
    %643 = vmatpush.msra.mxu0 %v539
    %644 = vmatpush.msra.mxu0 %v538
    %645 = vmatpush.msra.mxu0 %v537
    %646 = vmatpush.msra.mxu0 %v536
    %647 = vmatpush.msra.mxu0 %v535
    %648 = vmatpush.msra.mxu0 %v534
    %649 = vmatpush.msra.mxu0 %v533
    %650 = vmatpush.msra.mxu0 %v532
    %651 = vmatpush.msra.mxu0 %v531
    %652 = vmatpush.msra.mxu0 %v530
    %653 = vmatmul.f32.gmra.mxu0 %v525
    %v654 = vpop.f32.mrf.mxu0
    %v655 = vadd.f32 %v626, %v654
    %656 = vmatmul.f32.gmra.mxu0 %v526
    %v657 = vpop.f32.mrf.mxu0
    %v658 = vadd.f32 %v629, %v657
    %659 = vmatmul.f32.gmra.mxu0 %v527
    %v660 = vpop.f32.mrf.mxu0
    %v661 = vadd.f32 %v632, %v660
    %662 = vmatmul.f32.gmra.mxu0 %v528
    %v663 = vpop.f32.mrf.mxu0
    %v664 = vadd.f32 %v635, %v663
    %665 = vdwg.mxu0
    %s666 = scalar_lea.vmem [#allocation5], 32
    %v667 = vld [vmem:[%s666] sm:$0xff]
    %v668 = vld [vmem:[%s666 + $0x8] sm:$0xff]
    %v669 = vld [vmem:[%s666 + $0x10] sm:$0xff]
    %v670 = vld [vmem:[%s666 + $0x18] sm:$0xff]
    %v672 = vsel %vm550, %v667, 0
    %v675 = vsel %vm550, %v668, 0
    %v678 = vsel %vm550, %v669, 0
    %v681 = vsel %vm550, %v670, 0
    %683 = vmatpush.msra.mxu0 0.0
    %684 = vmatpush.msra.mxu0 0.0
    %685 = vmatpush.msra.mxu0 0.0
    %686 = vmatpush.msra.mxu0 0.0
    %687 = vmatpush.msra.mxu0 0.0
    %688 = vmatpush.msra.mxu0 0.0
    %689 = vmatpush.msra.mxu0 0.0
    %690 = vmatpush.msra.mxu0 0.0
    %691 = vmatpush.msra.mxu0 0.0
    %692 = vmatpush.msra.mxu0 0.0
    %693 = vmatpush.msra.mxu0 0.0
    %694 = vmatpush.msra.mxu0 0.0
    %695 = vmatpush.msra.mxu0 %v528
    %696 = vmatpush.msra.mxu0 %v527
    %697 = vmatpush.msra.mxu0 %v526
    %698 = vmatpush.msra.mxu0 %v525
    %699 = vmatmul.f32.gmra.mxu0 %v672
    %v700 = vpop.f32.mrf.mxu0
    %v701 = vadd.f32 0.0, %v700
    %702 = vmatmul.f32.gmra.mxu0 %v675
    %v703 = vpop.f32.mrf.mxu0
    %v704 = vadd.f32 0.0, %v703
    %705 = vmatmul.f32.gmra.mxu0 %v678
    %v706 = vpop.f32.mrf.mxu0
    %v707 = vadd.f32 0.0, %v706
    %708 = vmatmul.f32.gmra.mxu0 %v681
    %v709 = vpop.f32.mrf.mxu0
    %v710 = vadd.f32 0.0, %v709
    %711 = vdwg.mxu0
    %s712 = scalar_lea.vmem [#allocation2], 256
    %v713 = vld [vmem:[%s712] sm:$0xff]
    %v714 = vld [vmem:[%s712 + $0x8] sm:$0xff]
    %v715 = vld [vmem:[%s712 + $0x10] sm:$0xff]
    %v716 = vld [vmem:[%s712 + $0x18] sm:$0xff]
    %v717 = vld [vmem:[%s712 + $0x20] sm:$0xff]
    %v718 = vld [vmem:[%s712 + $0x28] sm:$0xff]
    %v719 = vld [vmem:[%s712 + $0x30] sm:$0xff]
    %v720 = vld [vmem:[%s712 + $0x38] sm:$0xff]
    %v721 = vld [vmem:[%s712 + $0x40] sm:$0xff]
    %v722 = vld [vmem:[%s712 + $0x48] sm:$0xff]
    %v723 = vld [vmem:[%s712 + $0x50] sm:$0xff]
    %v724 = vld [vmem:[%s712 + $0x58] sm:$0xff]
    %v725 = vld [vmem:[%s712 + $0x60] sm:$0xff]
    %v726 = vld [vmem:[%s712 + $0x68] sm:$0xff]
    %v727 = vld [vmem:[%s712 + $0x70] sm:$0xff]
    %v728 = vld [vmem:[%s712 + $0x78] sm:$0xff]
    %729 = vmatpush.msra.mxu0 %v728
    %730 = vmatpush.msra.mxu0 %v727
    %731 = vmatpush.msra.mxu0 %v726
    %732 = vmatpush.msra.mxu0 %v725
    %733 = vmatpush.msra.mxu0 %v724
    %734 = vmatpush.msra.mxu0 %v723
    %735 = vmatpush.msra.mxu0 %v722
    %736 = vmatpush.msra.mxu0 %v721
    %737 = vmatpush.msra.mxu0 %v720
    %738 = vmatpush.msra.mxu0 %v719
    %739 = vmatpush.msra.mxu0 %v718
    %740 = vmatpush.msra.mxu0 %v717
    %741 = vmatpush.msra.mxu0 %v716
    %742 = vmatpush.msra.mxu0 %v715
    %743 = vmatpush.msra.mxu0 %v714
    %744 = vmatpush.msra.mxu0 %v713
    %745 = vmatmul.f32.gmra.mxu0 %v701
    %v746 = vpop.f32.mrf.mxu0
    %v747 = vadd.f32 0.0, %v746
    %748 = vmatmul.f32.gmra.mxu0 %v704
    %v749 = vpop.f32.mrf.mxu0
    %v750 = vadd.f32 0.0, %v749
    %751 = vmatmul.f32.gmra.mxu0 %v707
    %v752 = vpop.f32.mrf.mxu0
    %v753 = vadd.f32 0.0, %v752
    %754 = vmatmul.f32.gmra.mxu0 %v710
    %v755 = vpop.f32.mrf.mxu0
    %v756 = vadd.f32 0.0, %v755
    %757 = vdwg.mxu0
    %v758 = vadd.f32 %v655, %v747
    %v759 = vadd.f32 %v658, %v750
    %v760 = vadd.f32 %v661, %v753
    %v761 = vadd.f32 %v664, %v756
    %v762 = vld [vmem:[#allocation13] sm:$0x1]
    %v763 = vld [vmem:[#allocation14] sm:$0x1]
    %v764 = vadd.f32 %v758, %v759
    %v765 = vadd.f32 %v764, %v760
    %v766 = vadd.f32 %v765, %v761
    %v767 = vrot.slane %v766, 4
    %v768 = vadd.f32 %v766, %v767
    %v769 = vrot.slane %v768, 2
    %v770 = vadd.f32 %v768, %v769
    %v771 = vrot.slane %v770, 1
    %v772 = vadd.f32 %v770, %v771
    %773 = vmatpush.msra.mxu0 %v379
    %774 = vmatpush.msra.mxu0 %v378
    %775 = vmatpush.msra.mxu0 %v377
    %776 = vmatpush.msra.mxu0 %v376
    %777 = vmatpush.msra.mxu0 %v375
    %778 = vmatpush.msra.mxu0 %v374
    %779 = vmatpush.msra.mxu0 %v373
    %780 = vmatpush.msra.mxu0 %v372
    %781 = vmatpush.msra.mxu0 %v371
    %782 = vmatpush.msra.mxu0 %v370
    %783 = vmatpush.msra.mxu0 %v369
    %784 = vmatpush.msra.mxu0 %v368
    %785 = vmatpush.msra.mxu0 %v367
    %786 = vmatpush.msra.mxu0 %v366
    %787 = vmatpush.msra.mxu0 %v365
    %788 = vmatpush.msra.mxu0 %v364
    %789 = vmatmul.f32.gmra.mxu0 %v772
    %v790 = vpop.f32.mrf.mxu0
    %v791 = vadd.f32 0.0, %v790
    %792 = vdwg.mxu0
    %v794 = vsel %vm412, %v791, 0
    %796 = vmatpush.msra.mxu0 0.0
    %797 = vmatpush.msra.mxu0 0.0
    %798 = vmatpush.msra.mxu0 0.0
    %799 = vmatpush.msra.mxu0 0.0
    %800 = vmatpush.msra.mxu0 0.0
    %801 = vmatpush.msra.mxu0 0.0
    %802 = vmatpush.msra.mxu0 0.0
    %803 = vmatpush.msra.mxu0 0.0
    %804 = vmatpush.msra.mxu0 0.0
    %805 = vmatpush.msra.mxu0 0.0
    %806 = vmatpush.msra.mxu0 0.0
    %807 = vmatpush.msra.mxu0 0.0
    %808 = vmatpush.msra.mxu0 0.0
    %809 = vmatpush.msra.mxu0 0.0
    %810 = vmatpush.msra.mxu0 0.0
    %811 = vmatpush.msra.mxu0 %v380
    %812 = vmatmul.f32.gmra.mxu0 %v794
    %v813 = vpop.f32.mrf.mxu0
    %v814 = vadd.f32 0.0, %v813
    %815 = vdwg.mxu0
    %v816 = vmul.f32 %v814, 0.001953125
    %v817 = vperm.slane %v816, 0
    %v818 = vsub.f32 %v758, %v817
    %v819 = vsub.f32 %v759, %v817
    %v820 = vsub.f32 %v760, %v817
    %v821 = vsub.f32 %v761, %v817
    %v822 = vmul.f32 %v818, %v818
    %v823 = vmul.f32 %v819, %v819
    %v824 = vmul.f32 %v820, %v820
    %v825 = vmul.f32 %v821, %v821
    %v826 = vadd.f32 %v822, %v823
    %v827 = vadd.f32 %v826, %v824
    %v828 = vadd.f32 %v827, %v825
    %v829 = vrot.slane %v828, 4
    %v830 = vadd.f32 %v828, %v829
    %v831 = vrot.slane %v830, 2
    %v832 = vadd.f32 %v830, %v831
    %v833 = vrot.slane %v832, 1
    %v834 = vadd.f32 %v832, %v833
    %835 = vmatpush.msra.mxu0 %v379
    %836 = vmatpush.msra.mxu0 %v378
    %837 = vmatpush.msra.mxu0 %v377
    %838 = vmatpush.msra.mxu0 %v376
    %839 = vmatpush.msra.mxu0 %v375
    %840 = vmatpush.msra.mxu0 %v374
    %841 = vmatpush.msra.mxu0 %v373
    %842 = vmatpush.msra.mxu0 %v372
    %843 = vmatpush.msra.mxu0 %v371
    %844 = vmatpush.msra.mxu0 %v370
    %845 = vmatpush.msra.mxu0 %v369
    %846 = vmatpush.msra.mxu0 %v368
    %847 = vmatpush.msra.mxu0 %v367
    %848 = vmatpush.msra.mxu0 %v366
    %849 = vmatpush.msra.mxu0 %v365
    %850 = vmatpush.msra.mxu0 %v364
    %851 = vmatmul.f32.gmra.mxu0 %v834
    %v852 = vpop.f32.mrf.mxu0
    %v853 = vadd.f32 0.0, %v852
    %854 = vdwg.mxu0
    %v856 = vsel %vm412, %v853, 0
    %858 = vmatpush.msra.mxu0 0.0
    %859 = vmatpush.msra.mxu0 0.0
    %860 = vmatpush.msra.mxu0 0.0
    %861 = vmatpush.msra.mxu0 0.0
    %862 = vmatpush.msra.mxu0 0.0
    %863 = vmatpush.msra.mxu0 0.0
    %864 = vmatpush.msra.mxu0 0.0
    %865 = vmatpush.msra.mxu0 0.0
    %866 = vmatpush.msra.mxu0 0.0
    %867 = vmatpush.msra.mxu0 0.0
    %868 = vmatpush.msra.mxu0 0.0
    %869 = vmatpush.msra.mxu0 0.0
    %870 = vmatpush.msra.mxu0 0.0
    %871 = vmatpush.msra.mxu0 0.0
    %872 = vmatpush.msra.mxu0 0.0
    %873 = vmatpush.msra.mxu0 %v380
    %874 = vmatmul.f32.gmra.mxu0 %v856
    %v875 = vpop.f32.mrf.mxu0
    %v876 = vadd.f32 0.0, %v875
    %877 = vdwg.mxu0
    %v878 = vmul.f32 %v876, 0.001953125
    %v879 = vadd.f32 %v878, 1e-05
    %v880 = vrsqrt.pop %v879
    %v881 = vmul.f32 %v880, %v879
    %v882 = vmul.f32 %v881, %v880
    %v883 = vmul.f32 0.5, %v882
    %v884 = vsub.f32 1.5, %v883
    %v885 = vmul.f32 %v880, %v884
    %vm886 = vweird.f32 %v879
    %vm887 = vweird.f32 %v880
    %vm888 = vmor %vm886, %vm887
    %v889 = vsel %vm888, %v880, %v885
    %v890 = vmul.f32 %v762, %v889
    %v892 = vperm.slane %v890, 0
    %v894 = vmul.f32 %v818, %v892
    %v895 = vmul.f32 %v819, %v892
    %v896 = vmul.f32 %v820, %v892
    %v897 = vmul.f32 %v821, %v892
    %v899 = vperm.slane %v763, 0
    %v901 = vadd.f32 %v894, %v899
    %v902 = vadd.f32 %v895, %v899
    %v903 = vadd.f32 %v896, %v899
    %v904 = vadd.f32 %v897, %v899
    %v905 = vmax.f32 %v901, 0.0
    %v906 = vmax.f32 %v902, 0.0
    %v907 = vmax.f32 %v903, 0.0
    %v908 = vmax.f32 %v904, 0.0
    %v909 = vld [vmem:[#allocation7] sm:$0xff]
    %v910 = vld [vmem:[#allocation7 + $0x8] sm:$0xff]
    %v911 = vld [vmem:[#allocation7 + $0x10] sm:$0xff]
    %v912 = vld [vmem:[#allocation7 + $0x18] sm:$0xff]
    %v913 = vld [vmem:[#allocation7 + $0x20] sm:$0xff]
    %v914 = vld [vmem:[#allocation7 + $0x28] sm:$0xff]
    %v915 = vld [vmem:[#allocation7 + $0x30] sm:$0xff]
    %v916 = vld [vmem:[#allocation7 + $0x38] sm:$0xff]
    %v917 = vld [vmem:[#allocation7 + $0x40] sm:$0xff]
    %v918 = vld [vmem:[#allocation7 + $0x48] sm:$0xff]
    %v919 = vld [vmem:[#allocation7 + $0x50] sm:$0xff]
    %v920 = vld [vmem:[#allocation7 + $0x58] sm:$0xff]
    %v921 = vld [vmem:[#allocation7 + $0x60] sm:$0xff]
    %v922 = vld [vmem:[#allocation7 + $0x68] sm:$0xff]
    %v923 = vld [vmem:[#allocation7 + $0x70] sm:$0xff]
    %v924 = vld [vmem:[#allocation7 + $0x78] sm:$0xff]
    %v925 = vld [vmem:[#allocation7 + $0x80] sm:$0xff]
    %v926 = vld [vmem:[#allocation7 + $0x88] sm:$0xff]
    %v927 = vld [vmem:[#allocation7 + $0x90] sm:$0xff]
    %v928 = vld [vmem:[#allocation7 + $0x98] sm:$0xff]
    %v929 = vld [vmem:[#allocation7 + $0xa0] sm:$0xff]
    %v930 = vld [vmem:[#allocation7 + $0xa8] sm:$0xff]
    %v931 = vld [vmem:[#allocation7 + $0xb0] sm:$0xff]
    %v932 = vld [vmem:[#allocation7 + $0xb8] sm:$0xff]
    %v933 = vld [vmem:[#allocation7 + $0xc0] sm:$0xff]
    %v934 = vld [vmem:[#allocation7 + $0xc8] sm:$0xff]
    %v935 = vld [vmem:[#allocation7 + $0xd0] sm:$0xff]
    %v936 = vld [vmem:[#allocation7 + $0xd8] sm:$0xff]
    %v937 = vld [vmem:[#allocation7 + $0xe0] sm:$0xff]
    %v938 = vld [vmem:[#allocation7 + $0xe8] sm:$0xff]
    %v939 = vld [vmem:[#allocation7 + $0xf0] sm:$0xff]
    %v940 = vld [vmem:[#allocation7 + $0xf8] sm:$0xff]
    %v941 = vld [vmem:[#allocation7 + $0x100] sm:$0xff]
    %v942 = vld [vmem:[#allocation7 + $0x108] sm:$0xff]
    %v943 = vld [vmem:[#allocation7 + $0x110] sm:$0xff]
    %v944 = vld [vmem:[#allocation7 + $0x118] sm:$0xff]
    %v945 = vld [vmem:[#allocation7 + $0x120] sm:$0xff]
    %v946 = vld [vmem:[#allocation7 + $0x128] sm:$0xff]
    %v947 = vld [vmem:[#allocation7 + $0x130] sm:$0xff]
    %v948 = vld [vmem:[#allocation7 + $0x138] sm:$0xff]
    %v949 = vld [vmem:[#allocation7 + $0x140] sm:$0xff]
    %v950 = vld [vmem:[#allocation7 + $0x148] sm:$0xff]
    %v951 = vld [vmem:[#allocation7 + $0x150] sm:$0xff]
    %v952 = vld [vmem:[#allocation7 + $0x158] sm:$0xff]
    %v953 = vld [vmem:[#allocation7 + $0x160] sm:$0xff]
    %v954 = vld [vmem:[#allocation7 + $0x168] sm:$0xff]
    %v955 = vld [vmem:[#allocation7 + $0x170] sm:$0xff]
    %v956 = vld [vmem:[#allocation7 + $0x178] sm:$0xff]
    %v957 = vld [vmem:[#allocation7 + $0x180] sm:$0xff]
    %v958 = vld [vmem:[#allocation7 + $0x188] sm:$0xff]
    %v959 = vld [vmem:[#allocation7 + $0x190] sm:$0xff]
    %v960 = vld [vmem:[#allocation7 + $0x198] sm:$0xff]
    %v961 = vld [vmem:[#allocation7 + $0x1a0] sm:$0xff]
    %v962 = vld [vmem:[#allocation7 + $0x1a8] sm:$0xff]
    %v963 = vld [vmem:[#allocation7 + $0x1b0] sm:$0xff]
    %v964 = vld [vmem:[#allocation7 + $0x1b8] sm:$0xff]
    %v965 = vld [vmem:[#allocation7 + $0x1c0] sm:$0xff]
    %v966 = vld [vmem:[#allocation7 + $0x1c8] sm:$0xff]
    %v967 = vld [vmem:[#allocation7 + $0x1d0] sm:$0xff]
    %v968 = vld [vmem:[#allocation7 + $0x1d8] sm:$0xff]
    %v969 = vld [vmem:[#allocation7 + $0x1e0] sm:$0xff]
    %v970 = vld [vmem:[#allocation7 + $0x1e8] sm:$0xff]
    %v971 = vld [vmem:[#allocation7 + $0x1f0] sm:$0xff]
    %v972 = vld [vmem:[#allocation7 + $0x1f8] sm:$0xff]
    %973 = vmatpush.msra.mxu0 %v969
    %974 = vmatpush.msra.mxu0 %v965
    %975 = vmatpush.msra.mxu0 %v961
    %976 = vmatpush.msra.mxu0 %v957
    %977 = vmatpush.msra.mxu0 %v953
    %978 = vmatpush.msra.mxu0 %v949
    %979 = vmatpush.msra.mxu0 %v945
    %980 = vmatpush.msra.mxu0 %v941
    %981 = vmatpush.msra.mxu0 %v937
    %982 = vmatpush.msra.mxu0 %v933
    %983 = vmatpush.msra.mxu0 %v929
    %984 = vmatpush.msra.mxu0 %v925
    %985 = vmatpush.msra.mxu0 %v921
    %986 = vmatpush.msra.mxu0 %v917
    %987 = vmatpush.msra.mxu0 %v913
    %988 = vmatpush.msra.mxu0 %v909
    %989 = vmatmul.f32.gmra.mxu0 %v905
    %v990 = vpop.f32.mrf.mxu0
    %v991 = vadd.f32 0.0, %v990
    %992 = vmatmul.f32.gmra.mxu0 %v906
    %v993 = vpop.f32.mrf.mxu0
    %v994 = vadd.f32 0.0, %v993
    %995 = vmatmul.f32.gmra.mxu0 %v907
    %v996 = vpop.f32.mrf.mxu0
    %v997 = vadd.f32 0.0, %v996
    %998 = vmatmul.f32.gmra.mxu0 %v908
    %v999 = vpop.f32.mrf.mxu0
    %v1000 = vadd.f32 0.0, %v999
    %1001 = vdwg.mxu0
    %1002 = vmatpush.msra.mxu0 %v970
    %1003 = vmatpush.msra.mxu0 %v966
    %1004 = vmatpush.msra.mxu0 %v962
    %1005 = vmatpush.msra.mxu0 %v958
    %1006 = vmatpush.msra.mxu0 %v954
    %1007 = vmatpush.msra.mxu0 %v950
    %1008 = vmatpush.msra.mxu0 %v946
    %1009 = vmatpush.msra.mxu0 %v942
    %1010 = vmatpush.msra.mxu0 %v938
    %1011 = vmatpush.msra.mxu0 %v934
    %1012 = vmatpush.msra.mxu0 %v930
    %1013 = vmatpush.msra.mxu0 %v926
    %1014 = vmatpush.msra.mxu0 %v922
    %1015 = vmatpush.msra.mxu0 %v918
    %1016 = vmatpush.msra.mxu0 %v914
    %1017 = vmatpush.msra.mxu0 %v910
    %1018 = vmatmul.f32.gmra.mxu0 %v905
    %v1019 = vpop.f32.mrf.mxu0
    %v1020 = vadd.f32 0.0, %v1019
    %1021 = vmatmul.f32.gmra.mxu0 %v906
    %v1022 = vpop.f32.mrf.mxu0
    %v1023 = vadd.f32 0.0, %v1022
    %1024 = vmatmul.f32.gmra.mxu0 %v907
    %v1025 = vpop.f32.mrf.mxu0
    %v1026 = vadd.f32 0.0, %v1025
    %1027 = vmatmul.f32.gmra.mxu0 %v908
    %v1028 = vpop.f32.mrf.mxu0
    %v1029 = vadd.f32 0.0, %v1028
    %1030 = vdwg.mxu0
    %1031 = vmatpush.msra.mxu0 %v971
    %1032 = vmatpush.msra.mxu0 %v967
    %1033 = vmatpush.msra.mxu0 %v963
    %1034 = vmatpush.msra.mxu0 %v959
    %1035 = vmatpush.msra.mxu0 %v955
    %1036 = vmatpush.msra.mxu0 %v951
    %1037 = vmatpush.msra.mxu0 %v947
    %1038 = vmatpush.msra.mxu0 %v943
    %1039 = vmatpush.msra.mxu0 %v939
    %1040 = vmatpush.msra.mxu0 %v935
    %1041 = vmatpush.msra.mxu0 %v931
    %1042 = vmatpush.msra.mxu0 %v927
    %1043 = vmatpush.msra.mxu0 %v923
    %1044 = vmatpush.msra.mxu0 %v919
    %1045 = vmatpush.msra.mxu0 %v915
    %1046 = vmatpush.msra.mxu0 %v911
    %1047 = vmatmul.f32.gmra.mxu0 %v905
    %v1048 = vpop.f32.mrf.mxu0
    %v1049 = vadd.f32 0.0, %v1048
    %1050 = vmatmul.f32.gmra.mxu0 %v906
    %v1051 = vpop.f32.mrf.mxu0
    %v1052 = vadd.f32 0.0, %v1051
    %1053 = vmatmul.f32.gmra.mxu0 %v907
    %v1054 = vpop.f32.mrf.mxu0
    %v1055 = vadd.f32 0.0, %v1054
    %1056 = vmatmul.f32.gmra.mxu0 %v908
    %v1057 = vpop.f32.mrf.mxu0
    %v1058 = vadd.f32 0.0, %v1057
    %1059 = vdwg.mxu0
    %1060 = vmatpush.msra.mxu0 %v972
    %1061 = vmatpush.msra.mxu0 %v968
    %1062 = vmatpush.msra.mxu0 %v964
    %1063 = vmatpush.msra.mxu0 %v960
    %1064 = vmatpush.msra.mxu0 %v956
    %1065 = vmatpush.msra.mxu0 %v952
    %1066 = vmatpush.msra.mxu0 %v948
    %1067 = vmatpush.msra.mxu0 %v944
    %1068 = vmatpush.msra.mxu0 %v940
    %1069 = vmatpush.msra.mxu0 %v936
    %1070 = vmatpush.msra.mxu0 %v932
    %1071 = vmatpush.msra.mxu0 %v928
    %1072 = vmatpush.msra.mxu0 %v924
    %1073 = vmatpush.msra.mxu0 %v920
    %1074 = vmatpush.msra.mxu0 %v916
    %1075 = vmatpush.msra.mxu0 %v912
    %1076 = vmatmul.f32.gmra.mxu0 %v905
    %v1077 = vpop.f32.mrf.mxu0
    %v1078 = vadd.f32 0.0, %v1077
    %1079 = vmatmul.f32.gmra.mxu0 %v906
    %v1080 = vpop.f32.mrf.mxu0
    %v1081 = vadd.f32 0.0, %v1080
    %1082 = vmatmul.f32.gmra.mxu0 %v907
    %v1083 = vpop.f32.mrf.mxu0
    %v1084 = vadd.f32 0.0, %v1083
    %1085 = vmatmul.f32.gmra.mxu0 %v908
    %v1086 = vpop.f32.mrf.mxu0
    %v1087 = vadd.f32 0.0, %v1086
    %1088 = vdwg.mxu0
    %v1089 = vld [vmem:[%s7] sm:$0xff]
    %v1090 = vld [vmem:[%s7 + $0x8] sm:$0xff]
    %v1091 = vld [vmem:[%s7 + $0x10] sm:$0xff]
    %v1092 = vld [vmem:[%s7 + $0x18] sm:$0xff]
    %v1093 = vld [vmem:[%s7 + $0x20] sm:$0xff]
    %v1094 = vld [vmem:[%s7 + $0x28] sm:$0xff]
    %v1095 = vld [vmem:[%s7 + $0x30] sm:$0xff]
    %v1096 = vld [vmem:[%s7 + $0x38] sm:$0xff]
    %v1097 = vld [vmem:[%s7 + $0x40] sm:$0xff]
    %v1098 = vld [vmem:[%s7 + $0x48] sm:$0xff]
    %v1099 = vld [vmem:[%s7 + $0x50] sm:$0xff]
    %v1100 = vld [vmem:[%s7 + $0x58] sm:$0xff]
    %v1101 = vld [vmem:[%s7 + $0x60] sm:$0xff]
    %v1102 = vld [vmem:[%s7 + $0x68] sm:$0xff]
    %v1103 = vld [vmem:[%s7 + $0x70] sm:$0xff]
    %v1104 = vld [vmem:[%s7 + $0x78] sm:$0xff]
    %v1105 = vld [vmem:[%s7 + $0x80] sm:$0xff]
    %v1106 = vld [vmem:[%s7 + $0x88] sm:$0xff]
    %v1107 = vld [vmem:[%s7 + $0x90] sm:$0xff]
    %v1108 = vld [vmem:[%s7 + $0x98] sm:$0xff]
    %v1109 = vld [vmem:[%s7 + $0xa0] sm:$0xff]
    %v1110 = vld [vmem:[%s7 + $0xa8] sm:$0xff]
    %v1111 = vld [vmem:[%s7 + $0xb0] sm:$0xff]
    %v1112 = vld [vmem:[%s7 + $0xb8] sm:$0xff]
    %v1113 = vld [vmem:[%s7 + $0xc0] sm:$0xff]
    %v1114 = vld [vmem:[%s7 + $0xc8] sm:$0xff]
    %v1115 = vld [vmem:[%s7 + $0xd0] sm:$0xff]
    %v1116 = vld [vmem:[%s7 + $0xd8] sm:$0xff]
    %v1117 = vld [vmem:[%s7 + $0xe0] sm:$0xff]
    %v1118 = vld [vmem:[%s7 + $0xe8] sm:$0xff]
    %v1119 = vld [vmem:[%s7 + $0xf0] sm:$0xff]
    %v1120 = vld [vmem:[%s7 + $0xf8] sm:$0xff]
    %v1121 = vld [vmem:[%s7 + $0x100] sm:$0xff]
    %v1122 = vld [vmem:[%s7 + $0x108] sm:$0xff]
    %v1123 = vld [vmem:[%s7 + $0x110] sm:$0xff]
    %v1124 = vld [vmem:[%s7 + $0x118] sm:$0xff]
    %v1125 = vld [vmem:[%s7 + $0x120] sm:$0xff]
    %v1126 = vld [vmem:[%s7 + $0x128] sm:$0xff]
    %v1127 = vld [vmem:[%s7 + $0x130] sm:$0xff]
    %v1128 = vld [vmem:[%s7 + $0x138] sm:$0xff]
    %v1129 = vld [vmem:[%s7 + $0x140] sm:$0xff]
    %v1130 = vld [vmem:[%s7 + $0x148] sm:$0xff]
    %v1131 = vld [vmem:[%s7 + $0x150] sm:$0xff]
    %v1132 = vld [vmem:[%s7 + $0x158] sm:$0xff]
    %v1133 = vld [vmem:[%s7 + $0x160] sm:$0xff]
    %v1134 = vld [vmem:[%s7 + $0x168] sm:$0xff]
    %v1135 = vld [vmem:[%s7 + $0x170] sm:$0xff]
    %v1136 = vld [vmem:[%s7 + $0x178] sm:$0xff]
    %v1137 = vld [vmem:[%s7 + $0x180] sm:$0xff]
    %v1138 = vld [vmem:[%s7 + $0x188] sm:$0xff]
    %v1139 = vld [vmem:[%s7 + $0x190] sm:$0xff]
    %v1140 = vld [vmem:[%s7 + $0x198] sm:$0xff]
    %v1141 = vld [vmem:[%s7 + $0x1a0] sm:$0xff]
    %v1142 = vld [vmem:[%s7 + $0x1a8] sm:$0xff]
    %v1143 = vld [vmem:[%s7 + $0x1b0] sm:$0xff]
    %v1144 = vld [vmem:[%s7 + $0x1b8] sm:$0xff]
    %v1145 = vld [vmem:[%s7 + $0x1c0] sm:$0xff]
    %v1146 = vld [vmem:[%s7 + $0x1c8] sm:$0xff]
    %v1147 = vld [vmem:[%s7 + $0x1d0] sm:$0xff]
    %v1148 = vld [vmem:[%s7 + $0x1d8] sm:$0xff]
    %v1149 = vld [vmem:[%s7 + $0x1e0] sm:$0xff]
    %v1150 = vld [vmem:[%s7 + $0x1e8] sm:$0xff]
    %v1151 = vld [vmem:[%s7 + $0x1f0] sm:$0xff]
    %v1152 = vld [vmem:[%s7 + $0x1f8] sm:$0xff]
    %v1153 = vld [vmem:[#allocation8] sm:$0xff]
    %v1154 = vld [vmem:[#allocation8 + $0x8] sm:$0xff]
    %v1155 = vld [vmem:[#allocation8 + $0x10] sm:$0xff]
    %v1156 = vld [vmem:[#allocation8 + $0x18] sm:$0xff]
    %v1157 = vld [vmem:[#allocation8 + $0x20] sm:$0xff]
    %v1158 = vld [vmem:[#allocation8 + $0x28] sm:$0xff]
    %v1159 = vld [vmem:[#allocation8 + $0x30] sm:$0xff]
    %v1160 = vld [vmem:[#allocation8 + $0x38] sm:$0xff]
    %v1161 = vld [vmem:[#allocation8 + $0x40] sm:$0xff]
    %v1162 = vld [vmem:[#allocation8 + $0x48] sm:$0xff]
    %v1163 = vld [vmem:[#allocation8 + $0x50] sm:$0xff]
    %v1164 = vld [vmem:[#allocation8 + $0x58] sm:$0xff]
    %v1165 = vld [vmem:[#allocation8 + $0x60] sm:$0xff]
    %v1166 = vld [vmem:[#allocation8 + $0x68] sm:$0xff]
    %v1167 = vld [vmem:[#allocation8 + $0x70] sm:$0xff]
    %v1168 = vld [vmem:[#allocation8 + $0x78] sm:$0xff]
    %v1169 = vld [vmem:[%s13] sm:$0xf]
    %v1170 = vld [vmem:[%s14] sm:$0xf]
    %v1171 = vadd.f32 %v991, %v994
    %v1172 = vadd.f32 %v1171, %v997
    %v1173 = vadd.f32 %v1172, %v1000
    %v1174 = vrot.slane %v1173, 4
    %v1175 = vadd.f32 %v1173, %v1174
    %v1176 = vrot.slane %v1175, 2
    %v1177 = vadd.f32 %v1175, %v1176
    %v1178 = vrot.slane %v1177, 1
    %v1179 = vadd.f32 %v1177, %v1178
    %v1180 = vadd.f32 %v1020, %v1023
    %v1181 = vadd.f32 %v1180, %v1026
    %v1182 = vadd.f32 %v1181, %v1029
    %v1183 = vrot.slane %v1182, 4
    %v1184 = vadd.f32 %v1182, %v1183
    %v1185 = vrot.slane %v1184, 2
    %v1186 = vadd.f32 %v1184, %v1185
    %v1187 = vrot.slane %v1186, 1
    %v1188 = vadd.f32 %v1186, %v1187
    %v1189 = vadd.f32 %v1049, %v1052
    %v1190 = vadd.f32 %v1189, %v1055
    %v1191 = vadd.f32 %v1190, %v1058
    %v1192 = vrot.slane %v1191, 4
    %v1193 = vadd.f32 %v1191, %v1192
    %v1194 = vrot.slane %v1193, 2
    %v1195 = vadd.f32 %v1193, %v1194
    %v1196 = vrot.slane %v1195, 1
    %v1197 = vadd.f32 %v1195, %v1196
    %v1198 = vadd.f32 %v1078, %v1081
    %v1199 = vadd.f32 %v1198, %v1084
    %v1200 = vadd.f32 %v1199, %v1087
    %v1201 = vrot.slane %v1200, 4
    %v1202 = vadd.f32 %v1200, %v1201
    %v1203 = vrot.slane %v1202, 2
    %v1204 = vadd.f32 %v1202, %v1203
    %v1205 = vrot.slane %v1204, 1
    %v1206 = vadd.f32 %v1204, %v1205
    %1207 = vmatpush.msra.mxu0 %v1104
    %1208 = vmatpush.msra.mxu0 %v1103
    %1209 = vmatpush.msra.mxu0 %v1102
    %1210 = vmatpush.msra.mxu0 %v1101
    %1211 = vmatpush.msra.mxu0 %v1100
    %1212 = vmatpush.msra.mxu0 %v1099
    %1213 = vmatpush.msra.mxu0 %v1098
    %1214 = vmatpush.msra.mxu0 %v1097
    %1215 = vmatpush.msra.mxu0 %v1096
    %1216 = vmatpush.msra.mxu0 %v1095
    %1217 = vmatpush.msra.mxu0 %v1094
    %1218 = vmatpush.msra.mxu0 %v1093
    %1219 = vmatpush.msra.mxu0 %v1092
    %1220 = vmatpush.msra.mxu0 %v1091
    %1221 = vmatpush.msra.mxu0 %v1090
    %1222 = vmatpush.msra.mxu0 %v1089
    %1223 = vmatmul.f32.gmra.mxu0 %v1179
    %v1224 = vpop.f32.mrf.mxu0
    %v1225 = vadd.f32 0.0, %v1224
    %1226 = vdwg.mxu0
    %1227 = vmatpush.msra.mxu0 %v1120
    %1228 = vmatpush.msra.mxu0 %v1119
    %1229 = vmatpush.msra.mxu0 %v1118
    %1230 = vmatpush.msra.mxu0 %v1117
    %1231 = vmatpush.msra.mxu0 %v1116
    %1232 = vmatpush.msra.mxu0 %v1115
    %1233 = vmatpush.msra.mxu0 %v1114
    %1234 = vmatpush.msra.mxu0 %v1113
    %1235 = vmatpush.msra.mxu0 %v1112
    %1236 = vmatpush.msra.mxu0 %v1111
    %1237 = vmatpush.msra.mxu0 %v1110
    %1238 = vmatpush.msra.mxu0 %v1109
    %1239 = vmatpush.msra.mxu0 %v1108
    %1240 = vmatpush.msra.mxu0 %v1107
    %1241 = vmatpush.msra.mxu0 %v1106
    %1242 = vmatpush.msra.mxu0 %v1105
    %1243 = vmatmul.f32.gmra.mxu0 %v1188
    %v1244 = vpop.f32.mrf.mxu0
    %v1245 = vadd.f32 %v1225, %v1244
    %1246 = vdwg.mxu0
    %1247 = vmatpush.msra.mxu0 %v1136
    %1248 = vmatpush.msra.mxu0 %v1135
    %1249 = vmatpush.msra.mxu0 %v1134
    %1250 = vmatpush.msra.mxu0 %v1133
    %1251 = vmatpush.msra.mxu0 %v1132
    %1252 = vmatpush.msra.mxu0 %v1131
    %1253 = vmatpush.msra.mxu0 %v1130
    %1254 = vmatpush.msra.mxu0 %v1129
    %1255 = vmatpush.msra.mxu0 %v1128
    %1256 = vmatpush.msra.mxu0 %v1127
    %1257 = vmatpush.msra.mxu0 %v1126
    %1258 = vmatpush.msra.mxu0 %v1125
    %1259 = vmatpush.msra.mxu0 %v1124
    %1260 = vmatpush.msra.mxu0 %v1123
    %1261 = vmatpush.msra.mxu0 %v1122
    %1262 = vmatpush.msra.mxu0 %v1121
    %1263 = vmatmul.f32.gmra.mxu0 %v1197
    %v1264 = vpop.f32.mrf.mxu0
    %v1265 = vadd.f32 %v1245, %v1264
    %1266 = vdwg.mxu0
    %1267 = vmatpush.msra.mxu0 %v1152
    %1268 = vmatpush.msra.mxu0 %v1151
    %1269 = vmatpush.msra.mxu0 %v1150
    %1270 = vmatpush.msra.mxu0 %v1149
    %1271 = vmatpush.msra.mxu0 %v1148
    %1272 = vmatpush.msra.mxu0 %v1147
    %1273 = vmatpush.msra.mxu0 %v1146
    %1274 = vmatpush.msra.mxu0 %v1145
    %1275 = vmatpush.msra.mxu0 %v1144
    %1276 = vmatpush.msra.mxu0 %v1143
    %1277 = vmatpush.msra.mxu0 %v1142
    %1278 = vmatpush.msra.mxu0 %v1141
    %1279 = vmatpush.msra.mxu0 %v1140
    %1280 = vmatpush.msra.mxu0 %v1139
    %1281 = vmatpush.msra.mxu0 %v1138
    %1282 = vmatpush.msra.mxu0 %v1137
    %1283 = vmatmul.f32.gmra.mxu0 %v1206
    %v1284 = vpop.f32.mrf.mxu0
    %v1285 = vadd.f32 %v1265, %v1284
    %1286 = vdwg.mxu0
    %v1288 = vsel %vm550, %v1285, 0
    %1290 = vmatpush.msra.mxu0 0.0
    %1291 = vmatpush.msra.mxu0 0.0
    %1292 = vmatpush.msra.mxu0 0.0
    %1293 = vmatpush.msra.mxu0 0.0
    %1294 = vmatpush.msra.mxu0 0.0
    %1295 = vmatpush.msra.mxu0 0.0
    %1296 = vmatpush.msra.mxu0 0.0
    %1297 = vmatpush.msra.mxu0 0.0
    %1298 = vmatpush.msra.mxu0 0.0
    %1299 = vmatpush.msra.mxu0 0.0
    %1300 = vmatpush.msra.mxu0 0.0
    %1301 = vmatpush.msra.mxu0 0.0
    %1302 = vmatpush.msra.mxu0 %v1165
    %1303 = vmatpush.msra.mxu0 %v1161
    %1304 = vmatpush.msra.mxu0 %v1157
    %1305 = vmatpush.msra.mxu0 %v1153
    %1306 = vmatmul.f32.gmra.mxu0 %v1288
    %v1307 = vpop.f32.mrf.mxu0
    %v1308 = vadd.f32 0.0, %v1307
    %1309 = vdwg.mxu0
    %1310 = vmatpush.msra.mxu0 0.0
    %1311 = vmatpush.msra.mxu0 0.0
    %1312 = vmatpush.msra.mxu0 0.0
    %1313 = vmatpush.msra.mxu0 0.0
    %1314 = vmatpush.msra.mxu0 0.0
    %1315 = vmatpush.msra.mxu0 0.0
    %1316 = vmatpush.msra.mxu0 0.0
    %1317 = vmatpush.msra.mxu0 0.0
    %1318 = vmatpush.msra.mxu0 0.0
    %1319 = vmatpush.msra.mxu0 0.0
    %1320 = vmatpush.msra.mxu0 0.0
    %1321 = vmatpush.msra.mxu0 0.0
    %1322 = vmatpush.msra.mxu0 %v1166
    %1323 = vmatpush.msra.mxu0 %v1162
    %1324 = vmatpush.msra.mxu0 %v1158
    %1325 = vmatpush.msra.mxu0 %v1154
    %1326 = vmatmul.f32.gmra.mxu0 %v1288
    %v1327 = vpop.f32.mrf.mxu0
    %v1328 = vadd.f32 0.0, %v1327
    %1329 = vdwg.mxu0
    %1330 = vmatpush.msra.mxu0 0.0
    %1331 = vmatpush.msra.mxu0 0.0
    %1332 = vmatpush.msra.mxu0 0.0
    %1333 = vmatpush.msra.mxu0 0.0
    %1334 = vmatpush.msra.mxu0 0.0
    %1335 = vmatpush.msra.mxu0 0.0
    %1336 = vmatpush.msra.mxu0 0.0
    %1337 = vmatpush.msra.mxu0 0.0
    %1338 = vmatpush.msra.mxu0 0.0
    %1339 = vmatpush.msra.mxu0 0.0
    %1340 = vmatpush.msra.mxu0 0.0
    %1341 = vmatpush.msra.mxu0 0.0
    %1342 = vmatpush.msra.mxu0 %v1167
    %1343 = vmatpush.msra.mxu0 %v1163
    %1344 = vmatpush.msra.mxu0 %v1159
    %1345 = vmatpush.msra.mxu0 %v1155
    %1346 = vmatmul.f32.gmra.mxu0 %v1288
    %v1347 = vpop.f32.mrf.mxu0
    %v1348 = vadd.f32 0.0, %v1347
    %1349 = vdwg.mxu0
    %1350 = vmatpush.msra.mxu0 0.0
    %1351 = vmatpush.msra.mxu0 0.0
    %1352 = vmatpush.msra.mxu0 0.0
    %1353 = vmatpush.msra.mxu0 0.0
    %1354 = vmatpush.msra.mxu0 0.0
    %1355 = vmatpush.msra.mxu0 0.0
    %1356 = vmatpush.msra.mxu0 0.0
    %1357 = vmatpush.msra.mxu0 0.0
    %1358 = vmatpush.msra.mxu0 0.0
    %1359 = vmatpush.msra.mxu0 0.0
    %1360 = vmatpush.msra.mxu0 0.0
    %1361 = vmatpush.msra.mxu0 0.0
    %1362 = vmatpush.msra.mxu0 %v1168
    %1363 = vmatpush.msra.mxu0 %v1164
    %1364 = vmatpush.msra.mxu0 %v1160
    %1365 = vmatpush.msra.mxu0 %v1156
    %1366 = vmatmul.f32.gmra.mxu0 %v1288
    %v1367 = vpop.f32.mrf.mxu0
    %v1368 = vadd.f32 0.0, %v1367
    %1369 = vdwg.mxu0
    %v1370 = vmul.f32 %v1308, 0.001953125
    %v1371 = vmul.f32 %v1328, 0.001953125
    %v1372 = vmul.f32 %v1348, 0.001953125
    %v1373 = vmul.f32 %v1368, 0.001953125
    %v1374 = vperm.slane %v1370, 0
    %v1375 = vperm.slane %v1371, 0
    %v1376 = vperm.slane %v1372, 0
    %v1377 = vperm.slane %v1373, 0
    %v1378 = vsub.f32 %v991, %v1374
    %v1379 = vsub.f32 %v1020, %v1375
    %v1380 = vsub.f32 %v1049, %v1376
    %v1381 = vsub.f32 %v1078, %v1377
    %v1382 = vsub.f32 %v994, %v1374
    %v1383 = vsub.f32 %v1023, %v1375
    %v1384 = vsub.f32 %v1052, %v1376
    %v1385 = vsub.f32 %v1081, %v1377
    %v1386 = vsub.f32 %v997, %v1374
    %v1387 = vsub.f32 %v1026, %v1375
    %v1388 = vsub.f32 %v1055, %v1376
    %v1389 = vsub.f32 %v1084, %v1377
    %v1390 = vsub.f32 %v1000, %v1374
    %v1391 = vsub.f32 %v1029, %v1375
    %v1392 = vsub.f32 %v1058, %v1376
    %v1393 = vsub.f32 %v1087, %v1377
    %v1394 = vmul.f32 %v1378, %v1378
    %v1395 = vmul.f32 %v1379, %v1379
    %v1396 = vmul.f32 %v1380, %v1380
    %v1397 = vmul.f32 %v1381, %v1381
    %v1398 = vmul.f32 %v1382, %v1382
    %v1399 = vmul.f32 %v1383, %v1383
    %v1400 = vmul.f32 %v1384, %v1384
    %v1401 = vmul.f32 %v1385, %v1385
    %v1402 = vmul.f32 %v1386, %v1386
    %v1403 = vmul.f32 %v1387, %v1387
    %v1404 = vmul.f32 %v1388, %v1388
    %v1405 = vmul.f32 %v1389, %v1389
    %v1406 = vmul.f32 %v1390, %v1390
    %v1407 = vmul.f32 %v1391, %v1391
    %v1408 = vmul.f32 %v1392, %v1392
    %v1409 = vmul.f32 %v1393, %v1393
    %v1410 = vadd.f32 %v1394, %v1398
    %v1411 = vadd.f32 %v1410, %v1402
    %v1412 = vadd.f32 %v1411, %v1406
    %v1413 = vrot.slane %v1412, 4
    %v1414 = vadd.f32 %v1412, %v1413
    %v1415 = vrot.slane %v1414, 2
    %v1416 = vadd.f32 %v1414, %v1415
    %v1417 = vrot.slane %v1416, 1
    %v1418 = vadd.f32 %v1416, %v1417
    %v1419 = vadd.f32 %v1395, %v1399
    %v1420 = vadd.f32 %v1419, %v1403
    %v1421 = vadd.f32 %v1420, %v1407
    %v1422 = vrot.slane %v1421, 4
    %v1423 = vadd.f32 %v1421, %v1422
    %v1424 = vrot.slane %v1423, 2
    %v1425 = vadd.f32 %v1423, %v1424
    %v1426 = vrot.slane %v1425, 1
    %v1427 = vadd.f32 %v1425, %v1426
    %v1428 = vadd.f32 %v1396, %v1400
    %v1429 = vadd.f32 %v1428, %v1404
    %v1430 = vadd.f32 %v1429, %v1408
    %v1431 = vrot.slane %v1430, 4
    %v1432 = vadd.f32 %v1430, %v1431
    %v1433 = vrot.slane %v1432, 2
    %v1434 = vadd.f32 %v1432, %v1433
    %v1435 = vrot.slane %v1434, 1
    %v1436 = vadd.f32 %v1434, %v1435
    %v1437 = vadd.f32 %v1397, %v1401
    %v1438 = vadd.f32 %v1437, %v1405
    %v1439 = vadd.f32 %v1438, %v1409
    %v1440 = vrot.slane %v1439, 4
    %v1441 = vadd.f32 %v1439, %v1440
    %v1442 = vrot.slane %v1441, 2
    %v1443 = vadd.f32 %v1441, %v1442
    %v1444 = vrot.slane %v1443, 1
    %v1445 = vadd.f32 %v1443, %v1444
    %1446 = vmatpush.msra.mxu0 %v1104
    %1447 = vmatpush.msra.mxu0 %v1103
    %1448 = vmatpush.msra.mxu0 %v1102
    %1449 = vmatpush.msra.mxu0 %v1101
    %1450 = vmatpush.msra.mxu0 %v1100
    %1451 = vmatpush.msra.mxu0 %v1099
    %1452 = vmatpush.msra.mxu0 %v1098
    %1453 = vmatpush.msra.mxu0 %v1097
    %1454 = vmatpush.msra.mxu0 %v1096
    %1455 = vmatpush.msra.mxu0 %v1095
    %1456 = vmatpush.msra.mxu0 %v1094
    %1457 = vmatpush.msra.mxu0 %v1093
    %1458 = vmatpush.msra.mxu0 %v1092
    %1459 = vmatpush.msra.mxu0 %v1091
    %1460 = vmatpush.msra.mxu0 %v1090
    %1461 = vmatpush.msra.mxu0 %v1089
    %1462 = vmatmul.f32.gmra.mxu0 %v1418
    %v1463 = vpop.f32.mrf.mxu0
    %v1464 = vadd.f32 0.0, %v1463
    %1465 = vdwg.mxu0
    %1466 = vmatpush.msra.mxu0 %v1120
    %1467 = vmatpush.msra.mxu0 %v1119
    %1468 = vmatpush.msra.mxu0 %v1118
    %1469 = vmatpush.msra.mxu0 %v1117
    %1470 = vmatpush.msra.mxu0 %v1116
    %1471 = vmatpush.msra.mxu0 %v1115
    %1472 = vmatpush.msra.mxu0 %v1114
    %1473 = vmatpush.msra.mxu0 %v1113
    %1474 = vmatpush.msra.mxu0 %v1112
    %1475 = vmatpush.msra.mxu0 %v1111
    %1476 = vmatpush.msra.mxu0 %v1110
    %1477 = vmatpush.msra.mxu0 %v1109
    %1478 = vmatpush.msra.mxu0 %v1108
    %1479 = vmatpush.msra.mxu0 %v1107
    %1480 = vmatpush.msra.mxu0 %v1106
    %1481 = vmatpush.msra.mxu0 %v1105
    %1482 = vmatmul.f32.gmra.mxu0 %v1427
    %v1483 = vpop.f32.mrf.mxu0
    %v1484 = vadd.f32 %v1464, %v1483
    %1485 = vdwg.mxu0
    %1486 = vmatpush.msra.mxu0 %v1136
    %1487 = vmatpush.msra.mxu0 %v1135
    %1488 = vmatpush.msra.mxu0 %v1134
    %1489 = vmatpush.msra.mxu0 %v1133
    %1490 = vmatpush.msra.mxu0 %v1132
    %1491 = vmatpush.msra.mxu0 %v1131
    %1492 = vmatpush.msra.mxu0 %v1130
    %1493 = vmatpush.msra.mxu0 %v1129
    %1494 = vmatpush.msra.mxu0 %v1128
    %1495 = vmatpush.msra.mxu0 %v1127
    %1496 = vmatpush.msra.mxu0 %v1126
    %1497 = vmatpush.msra.mxu0 %v1125
    %1498 = vmatpush.msra.mxu0 %v1124
    %1499 = vmatpush.msra.mxu0 %v1123
    %1500 = vmatpush.msra.mxu0 %v1122
    %1501 = vmatpush.msra.mxu0 %v1121
    %1502 = vmatmul.f32.gmra.mxu0 %v1436
    %v1503 = vpop.f32.mrf.mxu0
    %v1504 = vadd.f32 %v1484, %v1503
    %1505 = vdwg.mxu0
    %1506 = vmatpush.msra.mxu0 %v1152
    %1507 = vmatpush.msra.mxu0 %v1151
    %1508 = vmatpush.msra.mxu0 %v1150
    %1509 = vmatpush.msra.mxu0 %v1149
    %1510 = vmatpush.msra.mxu0 %v1148
    %1511 = vmatpush.msra.mxu0 %v1147
    %1512 = vmatpush.msra.mxu0 %v1146
    %1513 = vmatpush.msra.mxu0 %v1145
    %1514 = vmatpush.msra.mxu0 %v1144
    %1515 = vmatpush.msra.mxu0 %v1143
    %1516 = vmatpush.msra.mxu0 %v1142
    %1517 = vmatpush.msra.mxu0 %v1141
    %1518 = vmatpush.msra.mxu0 %v1140
    %1519 = vmatpush.msra.mxu0 %v1139
    %1520 = vmatpush.msra.mxu0 %v1138
    %1521 = vmatpush.msra.mxu0 %v1137
    %1522 = vmatmul.f32.gmra.mxu0 %v1445
    %v1523 = vpop.f32.mrf.mxu0
    %v1524 = vadd.f32 %v1504, %v1523
    %1525 = vdwg.mxu0
    %v1527 = vsel %vm550, %v1524, 0
    %1529 = vmatpush.msra.mxu0 0.0
    %1530 = vmatpush.msra.mxu0 0.0
    %1531 = vmatpush.msra.mxu0 0.0
    %1532 = vmatpush.msra.mxu0 0.0
    %1533 = vmatpush.msra.mxu0 0.0
    %1534 = vmatpush.msra.mxu0 0.0
    %1535 = vmatpush.msra.mxu0 0.0
    %1536 = vmatpush.msra.mxu0 0.0
    %1537 = vmatpush.msra.mxu0 0.0
    %1538 = vmatpush.msra.mxu0 0.0
    %1539 = vmatpush.msra.mxu0 0.0
    %1540 = vmatpush.msra.mxu0 0.0
    %1541 = vmatpush.msra.mxu0 %v1165
    %1542 = vmatpush.msra.mxu0 %v1161
    %1543 = vmatpush.msra.mxu0 %v1157
    %1544 = vmatpush.msra.mxu0 %v1153
    %1545 = vmatmul.f32.gmra.mxu0 %v1527
    %v1546 = vpop.f32.mrf.mxu0
    %v1547 = vadd.f32 0.0, %v1546
    %1548 = vdwg.mxu0
    %1549 = vmatpush.msra.mxu0 0.0
    %1550 = vmatpush.msra.mxu0 0.0
    %1551 = vmatpush.msra.mxu0 0.0
    %1552 = vmatpush.msra.mxu0 0.0
    %1553 = vmatpush.msra.mxu0 0.0
    %1554 = vmatpush.msra.mxu0 0.0
    %1555 = vmatpush.msra.mxu0 0.0
    %1556 = vmatpush.msra.mxu0 0.0
    %1557 = vmatpush.msra.mxu0 0.0
    %1558 = vmatpush.msra.mxu0 0.0
    %1559 = vmatpush.msra.mxu0 0.0
    %1560 = vmatpush.msra.mxu0 0.0
    %1561 = vmatpush.msra.mxu0 %v1166
    %1562 = vmatpush.msra.mxu0 %v1162
    %1563 = vmatpush.msra.mxu0 %v1158
    %1564 = vmatpush.msra.mxu0 %v1154
    %1565 = vmatmul.f32.gmra.mxu0 %v1527
    %v1566 = vpop.f32.mrf.mxu0
    %v1567 = vadd.f32 0.0, %v1566
    %1568 = vdwg.mxu0
    %1569 = vmatpush.msra.mxu0 0.0
    %1570 = vmatpush.msra.mxu0 0.0
    %1571 = vmatpush.msra.mxu0 0.0
    %1572 = vmatpush.msra.mxu0 0.0
    %1573 = vmatpush.msra.mxu0 0.0
    %1574 = vmatpush.msra.mxu0 0.0
    %1575 = vmatpush.msra.mxu0 0.0
    %1576 = vmatpush.msra.mxu0 0.0
    %1577 = vmatpush.msra.mxu0 0.0
    %1578 = vmatpush.msra.mxu0 0.0
    %1579 = vmatpush.msra.mxu0 0.0
    %1580 = vmatpush.msra.mxu0 0.0
    %1581 = vmatpush.msra.mxu0 %v1167
    %1582 = vmatpush.msra.mxu0 %v1163
    %1583 = vmatpush.msra.mxu0 %v1159
    %1584 = vmatpush.msra.mxu0 %v1155
    %1585 = vmatmul.f32.gmra.mxu0 %v1527
    %v1586 = vpop.f32.mrf.mxu0
    %v1587 = vadd.f32 0.0, %v1586
    %1588 = vdwg.mxu0
    %1589 = vmatpush.msra.mxu0 0.0
    %1590 = vmatpush.msra.mxu0 0.0
    %1591 = vmatpush.msra.mxu0 0.0
    %1592 = vmatpush.msra.mxu0 0.0
    %1593 = vmatpush.msra.mxu0 0.0
    %1594 = vmatpush.msra.mxu0 0.0
    %1595 = vmatpush.msra.mxu0 0.0
    %1596 = vmatpush.msra.mxu0 0.0
    %1597 = vmatpush.msra.mxu0 0.0
    %1598 = vmatpush.msra.mxu0 0.0
    %1599 = vmatpush.msra.mxu0 0.0
    %1600 = vmatpush.msra.mxu0 0.0
    %1601 = vmatpush.msra.mxu0 %v1168
    %1602 = vmatpush.msra.mxu0 %v1164
    %1603 = vmatpush.msra.mxu0 %v1160
    %1604 = vmatpush.msra.mxu0 %v1156
    %1605 = vmatmul.f32.gmra.mxu0 %v1527
    %v1606 = vpop.f32.mrf.mxu0
    %v1607 = vadd.f32 0.0, %v1606
    %1608 = vdwg.mxu0
    %v1609 = vmul.f32 %v1547, 0.001953125
    %v1610 = vmul.f32 %v1567, 0.001953125
    %v1611 = vmul.f32 %v1587, 0.001953125
    %v1612 = vmul.f32 %v1607, 0.001953125
    %v1613 = vadd.f32 %v1609, 1e-05
    %v1614 = vadd.f32 %v1610, 1e-05
    %v1615 = vadd.f32 %v1611, 1e-05
    %v1616 = vadd.f32 %v1612, 1e-05
    %v1617 = vrsqrt.pop %v1613
    %v1618 = vmul.f32 %v1617, %v1613
    %v1619 = vmul.f32 %v1618, %v1617
    %v1620 = vmul.f32 0.5, %v1619
    %v1621 = vsub.f32 1.5, %v1620
    %v1622 = vmul.f32 %v1617, %v1621
    %vm1623 = vweird.f32 %v1613
    %vm1624 = vweird.f32 %v1617
    %vm1625 = vmor %vm1623, %vm1624
    %v1626 = vsel %vm1625, %v1617, %v1622
    %v1627 = vrsqrt.pop %v1614
    %v1628 = vmul.f32 %v1627, %v1614
    %v1629 = vmul.f32 %v1628, %v1627
    %v1630 = vmul.f32 0.5, %v1629
    %v1631 = vsub.f32 1.5, %v1630
    %v1632 = vmul.f32 %v1627, %v1631
    %vm1633 = vweird.f32 %v1614
    %vm1634 = vweird.f32 %v1627
    %vm1635 = vmor %vm1633, %vm1634
    %v1636 = vsel %vm1635, %v1627, %v1632
    %v1637 = vrsqrt.pop %v1615
    %v1638 = vmul.f32 %v1637, %v1615
    %v1639 = vmul.f32 %v1638, %v1637
    %v1640 = vmul.f32 0.5, %v1639
    %v1641 = vsub.f32 1.5, %v1640
    %v1642 = vmul.f32 %v1637, %v1641
    %vm1643 = vweird.f32 %v1615
    %vm1644 = vweird.f32 %v1637
    %vm1645 = vmor %vm1643, %vm1644
    %v1646 = vsel %vm1645, %v1637, %v1642
    %v1647 = vrsqrt.pop %v1616
    %v1648 = vmul.f32 %v1647, %v1616
    %v1649 = vmul.f32 %v1648, %v1647
    %v1650 = vmul.f32 0.5, %v1649
    %v1651 = vsub.f32 1.5, %v1650
    %v1652 = vmul.f32 %v1647, %v1651
    %vm1653 = vweird.f32 %v1616
    %vm1654 = vweird.f32 %v1647
    %vm1655 = vmor %vm1653, %vm1654
    %v1656 = vsel %vm1655, %v1647, %v1652
    %v1661 = vrot.slane %v1636, 7
    %v1662 = vrot.slane %v1646, 6
    %v1663 = vrot.slane %v1656, 5
    %vm1664 = vcmask 1040384
    %v1665 = vsel %vm1664, %v1626, %v1661
    %vm1666 = vcmask 1042434
    %v1667 = vsel %vm1666, %v1662, %v1663
    %vm1668 = vcmask 1041408
    %v1669 = vsel %vm1668, %v1665, %v1667
    %v1671 = vmul.f32 %v1169, %v1669
    %v1673 = vperm.slane %v1671, 0
    %v1674 = vperm.slane %v1671, 1
    %v1675 = vperm.slane %v1671, 2
    %v1676 = vperm.slane %v1671, 3
    %v1681 = vmul.f32 %v1378, %v1673
    %v1682 = vmul.f32 %v1379, %v1674
    %v1683 = vmul.f32 %v1380, %v1675
    %v1684 = vmul.f32 %v1381, %v1676
    %v1685 = vmul.f32 %v1382, %v1673
    %v1686 = vmul.f32 %v1383, %v1674
    %v1687 = vmul.f32 %v1384, %v1675
    %v1688 = vmul.f32 %v1385, %v1676
    %v1689 = vmul.f32 %v1386, %v1673
    %v1690 = vmul.f32 %v1387, %v1674
    %v1691 = vmul.f32 %v1388, %v1675
    %v1692 = vmul.f32 %v1389, %v1676
    %v1693 = vmul.f32 %v1390, %v1673
    %v1694 = vmul.f32 %v1391, %v1674
    %v1695 = vmul.f32 %v1392, %v1675
    %v1696 = vmul.f32 %v1393, %v1676
    %v1698 = vperm.slane %v1170, 0
    %v1699 = vperm.slane %v1170, 1
    %v1700 = vperm.slane %v1170, 2
    %v1701 = vperm.slane %v1170, 3
    %v1706 = vadd.f32 %v1681, %v1698
    %v1707 = vadd.f32 %v1682, %v1699
    %v1708 = vadd.f32 %v1683, %v1700
    %v1709 = vadd.f32 %v1684, %v1701
    %v1710 = vadd.f32 %v1685, %v1698
    %v1711 = vadd.f32 %v1686, %v1699
    %v1712 = vadd.f32 %v1687, %v1700
    %v1713 = vadd.f32 %v1688, %v1701
    %v1714 = vadd.f32 %v1689, %v1698
    %v1715 = vadd.f32 %v1690, %v1699
    %v1716 = vadd.f32 %v1691, %v1700
    %v1717 = vadd.f32 %v1692, %v1701
    %v1718 = vadd.f32 %v1693, %v1698
    %v1719 = vadd.f32 %v1694, %v1699
    %v1720 = vadd.f32 %v1695, %v1700
    %v1721 = vadd.f32 %v1696, %v1701
    %v1722 = vadd.f32 %v1706, %v168
    %v1723 = vadd.f32 %v1707, %v169
    %v1724 = vadd.f32 %v1708, %v170
    %v1725 = vadd.f32 %v1709, %v171
    %v1726 = vadd.f32 %v1710, %v172
    %v1727 = vadd.f32 %v1711, %v173
    %v1728 = vadd.f32 %v1712, %v174
    %v1729 = vadd.f32 %v1713, %v175
    %v1730 = vadd.f32 %v1714, %v176
    %v1731 = vadd.f32 %v1715, %v177
    %v1732 = vadd.f32 %v1716, %v178
    %v1733 = vadd.f32 %v1717, %v179
    %v1734 = vadd.f32 %v1718, %v180
    %v1735 = vadd.f32 %v1719, %v181
    %v1736 = vadd.f32 %v1720, %v182
    %v1737 = vadd.f32 %v1721, %v183
    %v1738 = vmax.f32 %v1722, 0.0
    %v1739 = vmax.f32 %v1723, 0.0
    %v1740 = vmax.f32 %v1724, 0.0
    %v1741 = vmax.f32 %v1725, 0.0
    %v1742 = vmax.f32 %v1726, 0.0
    %v1743 = vmax.f32 %v1727, 0.0
    %v1744 = vmax.f32 %v1728, 0.0
    %v1745 = vmax.f32 %v1729, 0.0
    %v1746 = vmax.f32 %v1730, 0.0
    %v1747 = vmax.f32 %v1731, 0.0
    %v1748 = vmax.f32 %v1732, 0.0
    %v1749 = vmax.f32 %v1733, 0.0
    %v1750 = vmax.f32 %v1734, 0.0
    %v1751 = vmax.f32 %v1735, 0.0
    %v1752 = vmax.f32 %v1736, 0.0
    %v1753 = vmax.f32 %v1737, 0.0
    %1754 = vst [vmem:[#allocation16] sm:$0xff] %v1738
    %1755 = vst [vmem:[#allocation16 + $0x8] sm:$0xff] %v1739
    %1756 = vst [vmem:[#allocation16 + $0x10] sm:$0xff] %v1740
    %1757 = vst [vmem:[#allocation16 + $0x18] sm:$0xff] %v1741
    %1758 = vst [vmem:[#allocation16 + $0x20] sm:$0xff] %v1742
    %1759 = vst [vmem:[#allocation16 + $0x28] sm:$0xff] %v1743
    %1760 = vst [vmem:[#allocation16 + $0x30] sm:$0xff] %v1744
    %1761 = vst [vmem:[#allocation16 + $0x38] sm:$0xff] %v1745
    %1762 = vst [vmem:[#allocation16 + $0x40] sm:$0xff] %v1746
    %1763 = vst [vmem:[#allocation16 + $0x48] sm:$0xff] %v1747
    %1764 = vst [vmem:[#allocation16 + $0x50] sm:$0xff] %v1748
    %1765 = vst [vmem:[#allocation16 + $0x58] sm:$0xff] %v1749
    %1766 = vst [vmem:[#allocation16 + $0x60] sm:$0xff] %v1750
    %1767 = vst [vmem:[#allocation16 + $0x68] sm:$0xff] %v1751
    %1768 = vst [vmem:[#allocation16 + $0x70] sm:$0xff] %v1752
    %1769 = vst [vmem:[#allocation16 + $0x78] sm:$0xff] %v1753
    // Predicated region
    $region94: #{tpu_custom_call.1} parent=1 // pred_check
      _
    $region95: #{tpu_custom_call.1} parent=1 // pred_check_branch
      %1771 = sbr.rel (0) target = $region97
    $region96: #{tpu_custom_call.1} parent=1 // pred_region
      %1773 = vsyncadd [#allocation4], 0
      %s1774 = sshll.u32 [#allocation16], 4
      %s1775 = int_to_ptr.vmem [resolvable:$true] %s1774
      %s1776 = sshll.u32 %s15, 4
      %s1777 = int_to_ptr.hbm [resolvable:$true] %s1776
      %1782 = dma.vmem_to_hbm [thread:$0]  %s1775, 2048, %s1777, [#allocation4], 512, 512, 32
    $region97: #{tpu_custom_call.1} parent=1 // pred_fallthru
      _
    // Predicated region
    $region98: #{tpu_custom_call.1} parent=1 // pred_check
      _
    $region99: #{tpu_custom_call.1} parent=1 // pred_check_branch
      %1784 = sbr.rel (0) target = $region101
    $region100: #{tpu_custom_call.1} parent=1 // pred_region
      %1786 = dma.done [#allocation4], 2048
    $region101: #{tpu_custom_call.1} parent=1 // pred_fallthru
      _
    %1787 = vsyncpa [#allocation3], 1
    %1788 = vsyncpa [#allocation6], 1
    %1789 = vsyncpa [#allocation9], 1
    %1790 = vsyncpa [#allocation12], 1
    %1791 = vsyncpa [#allocation15], 1
    %1792 = vsyncpa [#allocation4], 1

</llo_original>
